<compile_context>
chip_gen: v7x
topology: tpu7x:2x2x1
jax: 0.10.0
libtpu: 0.0.40
codegen_flags: <defaults>
</compile_context>

<pallas_src>
import jax
import jax.numpy as jnp
from jax.experimental import pallas as pl
from jax.experimental.pallas import tpu as pltpu

EPS = 1e-05

# Conservative per-block VMEM budget (in + out, double-buffered) in bytes.
_VMEM_BLOCK_BUDGET = 8 << 20


def bn_relu_kernel(x_ref, gamma_ref, beta_ref, o_ref):
    # x_ref: (N, TC, HW)  -- channels on sublanes, spatial on lanes
    # gamma_ref, beta_ref: (TC, 1)
    x = x_ref[...].astype(jnp.float32)
    n, tc, hw = x.shape
    inv_r = 1.0 / (n * hw)

    # Pass 1: per-channel mean. Fold batch axis first (cheap vreg adds), then
    # reduce the lane (spatial) axis on the XLU.
    s = jnp.sum(jnp.sum(x, axis=0), axis=1, keepdims=True)        # (TC, 1)
    mean = s * inv_r                                               # (TC, 1)

    # Pass 2: per-channel variance around the mean (robust to cancellation;
    # free here since x is VMEM-resident and the kernel is HBM-bound).
    d = x - mean[None, :, :]
    ss = jnp.sum(jnp.sum(d * d, axis=0), axis=1, keepdims=True)    # (TC, 1)
    var = ss * inv_r                                               # biased (training-mode)
    inv_std = jax.lax.rsqrt(var + EPS)

    # Fold affine into one per-channel scale/shift.
    scale = gamma_ref[...] * inv_std                               # (TC, 1)
    shift = beta_ref[...] - mean * scale                           # (TC, 1)

    y = x * scale[None, :, :] + shift[None, :, :]
    o_ref[...] = jnp.maximum(y, 0.0).astype(o_ref.dtype)


def _tensorcores_per_chip():
    """Best-effort detection: only v7-class chips expose 2 TCs per device."""
    try:
        kind = jax.devices()[0].device_kind.lower()
    except Exception:
        return 1
    return 2 if ("v7" in kind or "7x" in kind) else 1


def _choose_grid(C, n_cores, bytes_per_channel_block):
    """Pick (n_tiles, c_tile): fewest stripes that (a) give each TensorCore a
    stripe, (b) keep c_tile a multiple of 8 (or full C), and (c) keep the
    double-buffered in+out block under the VMEM budget."""
    for n_tiles in range(1, C + 1):
        if C % n_tiles:
            continue
        c_tile = C // n_tiles
        if c_tile != C and c_tile % 8 != 0:
            continue  # sublane constraint
        if n_tiles < n_cores:
            continue  # need at least one stripe per TensorCore
        if 4 * c_tile * bytes_per_channel_block > _VMEM_BLOCK_BUDGET:
            continue  # in + out, double-buffered
        return n_tiles, c_tile
    # Degenerate fallback: one full-extent stripe (always layout-legal).
    return 1, C


def batchnorm_relu(x_nchw, gamma, beta):
    """x_nchw: (N, C, H, W) float32; gamma, beta: (C,) float32."""
    N, C, H, W = x_nchw.shape
    HW = H * W

    # Pure reshapes -- no HBM transpose traffic.
    x3d = x_nchw.reshape(N, C, HW)
    g2d = gamma.reshape(C, 1)
    b2d = beta.reshape(C, 1)

    n_cores = _tensorcores_per_chip()
    itemsize = jnp.dtype(x_nchw.dtype).itemsize
    n_tiles, c_tile = _choose_grid(C, n_cores, N * HW * itemsize)

    cost = pl.CostEstimate(
        flops=10 * N * C * HW,
        transcendentals=C,
        bytes_accessed=2 * N * C * HW * itemsize + 2 * C * 4,
    )

    def run(dim_sem):
        return pl.pallas_call(
            bn_relu_kernel,
            out_shape=jax.ShapeDtypeStruct((N, C, HW), x_nchw.dtype),
            grid_spec=pltpu.PrefetchScalarGridSpec(
                num_scalar_prefetch=0,
                grid=(n_tiles,),
                in_specs=[
                    pl.BlockSpec((N, c_tile, HW), lambda j: (0, j, 0)),
                    pl.BlockSpec((c_tile, 1), lambda j: (j, 0)),
                    pl.BlockSpec((c_tile, 1), lambda j: (j, 0)),
                ],
                out_specs=pl.BlockSpec((N, c_tile, HW), lambda j: (0, j, 0)),
            ),
            compiler_params=pltpu.CompilerParams(dimension_semantics=dim_sem),
            cost_estimate=cost,
        )(x3d, g2d, b2d)

    if n_tiles > 1 and n_cores > 1:
        # v7x: pin one 128-channel stripe per TensorCore.
        try:
            out3d = run((pltpu.CORE_PARALLEL,))
        except Exception:
            out3d = run(("parallel",))
    elif n_tiles > 1:
        out3d = run(("parallel",))
    else:
        # Single stripe on single-TC chips: one grid step, minimal overhead.
        out3d = run(("arbitrary",))

    return out3d.reshape(N, C, H, W)


def batchnorm_relu_ref(x_nchw, gamma, beta):
    # pure-JAX reference (training-mode BatchNorm2d + ReLU)
    mean = jnp.mean(x_nchw, axis=(0, 2, 3), keepdims=True)
    var = jnp.mean((x_nchw - mean) ** 2, axis=(0, 2, 3), keepdims=True)
    y = (x_nchw - mean) * jax.lax.rsqrt(var + EPS)
    y = y * gamma.reshape(1, -1, 1, 1) + beta.reshape(1, -1, 1, 1)
    return jnp.maximum(y, 0.0)


if __name__ == "__main__":
    key = jax.random.PRNGKey(0)
    kx, kg, kb = jax.random.split(key, 3)

    # Shapes implied by the module: BatchNorm2d(256) on input [1, 256, 28, 28].
    N, C, H, W = 1, 256, 28, 28
    x = jax.random.normal(kx, (N, C, H, W), dtype=jnp.float32)

    # Deterministic synthetic affine params (perturbed so the affine path is
    # actually exercised).
    gamma = 1.0 + 0.1 * jax.random.normal(kg, (C,), dtype=jnp.float32)
    beta = 0.1 * jax.random.normal(kb, (C,), dtype=jnp.float32)

    out = batchnorm_relu(x, gamma, beta)
    out = jax.block_until_ready(out)

    ref = batchnorm_relu_ref(x, gamma, beta)
    assert out.shape == (N, C, H, W)
    assert jnp.allclose(out, ref, atol=1e-4, rtol=1e-4)

    print("KERNEL_OK")
</pallas_src>

<mosaic_0001>
module attributes {stable_mosaic.version = 11 : i64} {
  func.func @bn_relu_kernel(%arg0: i32, %arg1: memref<1x256x784xf32, #tpu.memory_space<vmem>>, %arg2: memref<256x1xf32, #tpu.memory_space<vmem>>, %arg3: memref<256x1xf32, #tpu.memory_space<vmem>>, %arg4: memref<1x256x784xf32, #tpu.memory_space<vmem>>) attributes {dimension_semantics = [#tpu.dimension_semantics<arbitrary>], iteration_bounds = array<i64: 1>, scalar_prefetch = 0 : i64, scratch_operands = 0 : i64, tpu.core_type = #tpu.core_type<tc>, window_params = [{transform_indices = @transform_0, window_bounds = array<i64: 1, 256, 784>}, {transform_indices = @transform_1, window_bounds = array<i64: 256, 1>}, {transform_indices = @transform_2, window_bounds = array<i64: 256, 1>}, {transform_indices = @transform_3, window_bounds = array<i64: 1, 256, 784>}]} {
    %c0 = arith.constant 0 : index
    %c0_0 = arith.constant 0 : index
    %c0_1 = arith.constant 0 : index
    %0 = vector.load %arg1[%c0, %c0_0, %c0_1] : memref<1x256x784xf32, #tpu.memory_space<vmem>>, vector<1x256x784xf32>
    %cst = arith.constant dense<0.000000e+00> : vector<256x784xf32>
    %1 = vector.multi_reduction <add>, %0, %cst [0] : vector<1x256x784xf32> to vector<256x784xf32>
    %cst_2 = arith.constant dense<0.000000e+00> : vector<256xf32>
    %2 = vector.multi_reduction <add>, %1, %cst_2 [1] : vector<256x784xf32> to vector<256xf32>
    %3 = vector.shape_cast %2 : vector<256xf32> to vector<256x1xf32>
    %cst_3 = arith.constant 0.00127551018 : f32
    %4 = vector.broadcast %cst_3 : f32 to vector<256x1xf32>
    %5 = arith.mulf %3, %4 : vector<256x1xf32>
    %6 = vector.shape_cast %5 : vector<256x1xf32> to vector<1x256x1xf32>
    %7 = vector.broadcast %6 : vector<1x256x1xf32> to vector<1x256x784xf32>
    %8 = arith.subf %0, %7 : vector<1x256x784xf32>
    %9 = arith.mulf %8, %8 : vector<1x256x784xf32>
    %cst_4 = arith.constant dense<0.000000e+00> : vector<256x784xf32>
    %10 = vector.multi_reduction <add>, %9, %cst_4 [0] : vector<1x256x784xf32> to vector<256x784xf32>
    %cst_5 = arith.constant dense<0.000000e+00> : vector<256xf32>
    %11 = vector.multi_reduction <add>, %10, %cst_5 [1] : vector<256x784xf32> to vector<256xf32>
    %12 = vector.shape_cast %11 : vector<256xf32> to vector<256x1xf32>
    %cst_6 = arith.constant 0.00127551018 : f32
    %13 = vector.broadcast %cst_6 : f32 to vector<256x1xf32>
    %14 = arith.mulf %12, %13 : vector<256x1xf32>
    %cst_7 = arith.constant 9.99999974E-6 : f32
    %15 = vector.broadcast %cst_7 : f32 to vector<256x1xf32>
    %16 = arith.addf %14, %15 : vector<256x1xf32>
    %17 = math.rsqrt %16 : vector<256x1xf32>
    %c0_8 = arith.constant 0 : index
    %c0_9 = arith.constant 0 : index
    %18 = vector.load %arg2[%c0_8, %c0_9] : memref<256x1xf32, #tpu.memory_space<vmem>>, vector<256x1xf32>
    %19 = arith.mulf %18, %17 : vector<256x1xf32>
    %c0_10 = arith.constant 0 : index
    %c0_11 = arith.constant 0 : index
    %20 = vector.load %arg3[%c0_10, %c0_11] : memref<256x1xf32, #tpu.memory_space<vmem>>, vector<256x1xf32>
    %21 = arith.mulf %5, %19 : vector<256x1xf32>
    %22 = arith.subf %20, %21 : vector<256x1xf32>
    %23 = vector.shape_cast %19 : vector<256x1xf32> to vector<1x256x1xf32>
    %24 = vector.broadcast %23 : vector<1x256x1xf32> to vector<1x256x784xf32>
    %25 = arith.mulf %0, %24 : vector<1x256x784xf32>
    %26 = vector.shape_cast %22 : vector<256x1xf32> to vector<1x256x1xf32>
    %27 = vector.broadcast %26 : vector<1x256x1xf32> to vector<1x256x784xf32>
    %28 = arith.addf %25, %27 : vector<1x256x784xf32>
    %cst_12 = arith.constant 0.000000e+00 : f32
    %29 = vector.broadcast %cst_12 : f32 to vector<1x256x784xf32>
    %30 = arith.maximumf %28, %29 : vector<1x256x784xf32>
    %c0_13 = arith.constant 0 : index
    %c0_14 = arith.constant 0 : index
    %c0_15 = arith.constant 0 : index
    %31 = vector.load %arg4[%c0_13, %c0_14, %c0_15] : memref<1x256x784xf32, #tpu.memory_space<vmem>>, vector<1x256x784xf32>
    tpu.vector_store %arg4[%c0_13, %c0_14, %c0_15], %30 {strides = array<i32>} : memref<1x256x784xf32, #tpu.memory_space<vmem>>, vector<1x256x784xf32>,
    return
  }
  func.func @transform_0(%arg0: i32) -> (i32, i32, i32) {
    %c0_i32 = arith.constant 0 : i32
    %c0_i32_0 = arith.constant 0 : i32
    %c0_i32_1 = arith.constant 0 : i32
    return %c0_i32, %arg0, %c0_i32_0 : i32, i32, i32
  }
  func.func @transform_1(%arg0: i32) -> (i32, i32) {
    %c0_i32 = arith.constant 0 : i32
    %c0_i32_0 = arith.constant 0 : i32
    return %arg0, %c0_i32 : i32, i32
  }
  func.func @transform_2(%arg0: i32) -> (i32, i32) {
    %c0_i32 = arith.constant 0 : i32
    %c0_i32_0 = arith.constant 0 : i32
    return %arg0, %c0_i32 : i32, i32
  }
  func.func @transform_3(%arg0: i32) -> (i32, i32, i32) {
    %c0_i32 = arith.constant 0 : i32
    %c0_i32_0 = arith.constant 0 : i32
    %c0_i32_1 = arith.constant 0 : i32
    return %c0_i32, %arg0, %c0_i32_0 : i32, i32, i32
  }
}

</mosaic_0001>

<llo_original>
// kernel: tpu_custom_call.1
$region0: #{tpu_custom_call.1}
  #allocation0 [shape = 'u32[]', space=smem, size = 0x4, offset = 0x4, fixed_abs, tag = 'smem constant byte address 0x4 - core index']
  #allocation1 [shape = 'u32[144,128]{1,0:T(1,128)}', space=vmem, size = 0x12000, scoped, tag = 'internal scratch']
  %s0 = inlined_call_operand.vmem [shape: f32[1,256,784], index: 0, kind: input, shape index: {}]
  %s1 = inlined_call_operand.vmem [shape: f32[256,1], index: 1, kind: input, shape index: {}]
  %s2 = inlined_call_operand.vmem [shape: f32[256,1], index: 2, kind: input, shape index: {}]
  %s3 = inlined_call_operand.vmem [shape: f32[1,256,784], index: 3, kind: output, shape index: {}]
  %s4 = sld [smem:[#allocation0]]
  $region22: #{tpu_custom_call.1} parent=0
    _
  %s6 = ssub.s32 1, %s4
  %s7 = scalar_select 0, %s6, %s4
  // Predicated region
  $region2: #{tpu_custom_call.1} parent=0 // pred_check
    _
  $region3: #{tpu_custom_call.1} parent=0 // pred_check_branch
    %9 = sbr.rel (0) target = $region5
  $region4: #{tpu_custom_call.1} parent=0 // pred_region
    _
  $region5: #{tpu_custom_call.1} parent=0 // pred_fallthru
    _
  // Predicated region
  $region6: #{tpu_custom_call.1} parent=0 // pred_check
    _
  $region7: #{tpu_custom_call.1} parent=0 // pred_check_branch
    %11 = sbr.rel (0) target = $region9
  $region8: #{tpu_custom_call.1} parent=0 // pred_region
    _
  $region9: #{tpu_custom_call.1} parent=0 // pred_fallthru
    _
  // Predicated region
  $region10: #{tpu_custom_call.1} parent=0 // pred_check
    _
  $region11: #{tpu_custom_call.1} parent=0 // pred_check_branch
    %13 = sbr.rel (0) target = $region13
  $region12: #{tpu_custom_call.1} parent=0 // pred_region
    _
  $region13: #{tpu_custom_call.1} parent=0 // pred_fallthru
    _
  %v14 = vld [vmem:[%s0] sm:$0xff]
  %v15 = vld [vmem:[%s0 + $0x8] sm:$0xff]
  %v16 = vld [vmem:[%s0 + $0x10] sm:$0xff]
  %v17 = vld [vmem:[%s0 + $0x18] sm:$0xff]
  %v18 = vld [vmem:[%s0 + $0x20] sm:$0xff]
  %v19 = vld [vmem:[%s0 + $0x28] sm:$0xff]
  %v20 = vld [vmem:[%s0 + $0x30] sm:$0xff]
  %v21 = vld [vmem:[%s0 + $0x38] sm:$0xff]
  %v22 = vld [vmem:[%s0 + $0x40] sm:$0xff]
  %v23 = vld [vmem:[%s0 + $0x48] sm:$0xff]
  %v24 = vld [vmem:[%s0 + $0x50] sm:$0xff]
  %v25 = vld [vmem:[%s0 + $0x58] sm:$0xff]
  %v26 = vld [vmem:[%s0 + $0x60] sm:$0xff]
  %v27 = vld [vmem:[%s0 + $0x68] sm:$0xff]
  %v28 = vld [vmem:[%s0 + $0x70] sm:$0xff]
  %v29 = vld [vmem:[%s0 + $0x78] sm:$0xff]
  %v30 = vld [vmem:[%s0 + $0x80] sm:$0xff]
  %v31 = vld [vmem:[%s0 + $0x88] sm:$0xff]
  %v32 = vld [vmem:[%s0 + $0x90] sm:$0xff]
  %v33 = vld [vmem:[%s0 + $0x98] sm:$0xff]
  %v34 = vld [vmem:[%s0 + $0xa0] sm:$0xff]
  %v35 = vld [vmem:[%s0 + $0xa8] sm:$0xff]
  %v36 = vld [vmem:[%s0 + $0xb0] sm:$0xff]
  %v37 = vld [vmem:[%s0 + $0xb8] sm:$0xff]
  %v38 = vld [vmem:[%s0 + $0xc0] sm:$0xff]
  %v39 = vld [vmem:[%s0 + $0xc8] sm:$0xff]
  %v40 = vld [vmem:[%s0 + $0xd0] sm:$0xff]
  %v41 = vld [vmem:[%s0 + $0xd8] sm:$0xff]
  %v42 = vld [vmem:[%s0 + $0xe0] sm:$0xff]
  %v43 = vld [vmem:[%s0 + $0xe8] sm:$0xff]
  %v44 = vld [vmem:[%s0 + $0xf0] sm:$0xff]
  %v45 = vld [vmem:[%s0 + $0xf8] sm:$0xff]
  %v46 = vld [vmem:[%s0 + $0x100] sm:$0xff]
  %v47 = vld [vmem:[%s0 + $0x108] sm:$0xff]
  %v48 = vld [vmem:[%s0 + $0x110] sm:$0xff]
  %v49 = vld [vmem:[%s0 + $0x118] sm:$0xff]
  %v50 = vld [vmem:[%s0 + $0x120] sm:$0xff]
  %v51 = vld [vmem:[%s0 + $0x128] sm:$0xff]
  %v52 = vld [vmem:[%s0 + $0x130] sm:$0xff]
  %v53 = vld [vmem:[%s0 + $0x138] sm:$0xff]
  %v54 = vld [vmem:[%s0 + $0x140] sm:$0xff]
  %v55 = vld [vmem:[%s0 + $0x148] sm:$0xff]
  %v56 = vld [vmem:[%s0 + $0x150] sm:$0xff]
  %v57 = vld [vmem:[%s0 + $0x158] sm:$0xff]
  %v58 = vld [vmem:[%s0 + $0x160] sm:$0xff]
  %v59 = vld [vmem:[%s0 + $0x168] sm:$0xff]
  %v60 = vld [vmem:[%s0 + $0x170] sm:$0xff]
  %v61 = vld [vmem:[%s0 + $0x178] sm:$0xff]
  %v62 = vld [vmem:[%s0 + $0x180] sm:$0xff]
  %v63 = vld [vmem:[%s0 + $0x188] sm:$0xff]
  %v64 = vld [vmem:[%s0 + $0x190] sm:$0xff]
  %v65 = vld [vmem:[%s0 + $0x198] sm:$0xff]
  %v66 = vld [vmem:[%s0 + $0x1a0] sm:$0xff]
  %v67 = vld [vmem:[%s0 + $0x1a8] sm:$0xff]
  %v68 = vld [vmem:[%s0 + $0x1b0] sm:$0xff]
  %v69 = vld [vmem:[%s0 + $0x1b8] sm:$0xff]
  %v70 = vld [vmem:[%s0 + $0x1c0] sm:$0xff]
  %v71 = vld [vmem:[%s0 + $0x1c8] sm:$0xff]
  %v72 = vld [vmem:[%s0 + $0x1d0] sm:$0xff]
  %v73 = vld [vmem:[%s0 + $0x1d8] sm:$0xff]
  %v74 = vld [vmem:[%s0 + $0x1e0] sm:$0xff]
  %v75 = vld [vmem:[%s0 + $0x1e8] sm:$0xff]
  %v76 = vld [vmem:[%s0 + $0x1f0] sm:$0xff]
  %v77 = vld [vmem:[%s0 + $0x1f8] sm:$0xff]
  %v78 = vld [vmem:[%s0 + $0x200] sm:$0xff]
  %v79 = vld [vmem:[%s0 + $0x208] sm:$0xff]
  %v80 = vld [vmem:[%s0 + $0x210] sm:$0xff]
  %v81 = vld [vmem:[%s0 + $0x218] sm:$0xff]
  %v82 = vld [vmem:[%s0 + $0x220] sm:$0xff]
  %v83 = vld [vmem:[%s0 + $0x228] sm:$0xff]
  %v84 = vld [vmem:[%s0 + $0x230] sm:$0xff]
  %v85 = vld [vmem:[%s0 + $0x238] sm:$0xff]
  %v86 = vld [vmem:[%s0 + $0x240] sm:$0xff]
  %v87 = vld [vmem:[%s0 + $0x248] sm:$0xff]
  %v88 = vld [vmem:[%s0 + $0x250] sm:$0xff]
  %v89 = vld [vmem:[%s0 + $0x258] sm:$0xff]
  %v90 = vld [vmem:[%s0 + $0x260] sm:$0xff]
  %v91 = vld [vmem:[%s0 + $0x268] sm:$0xff]
  %v92 = vld [vmem:[%s0 + $0x270] sm:$0xff]
  %v93 = vld [vmem:[%s0 + $0x278] sm:$0xff]
  %v94 = vld [vmem:[%s0 + $0x280] sm:$0xff]
  %v95 = vld [vmem:[%s0 + $0x288] sm:$0xff]
  %v96 = vld [vmem:[%s0 + $0x290] sm:$0xff]
  %v97 = vld [vmem:[%s0 + $0x298] sm:$0xff]
  %v98 = vld [vmem:[%s0 + $0x2a0] sm:$0xff]
  %v99 = vld [vmem:[%s0 + $0x2a8] sm:$0xff]
  %v100 = vld [vmem:[%s0 + $0x2b0] sm:$0xff]
  %v101 = vld [vmem:[%s0 + $0x2b8] sm:$0xff]
  %v102 = vld [vmem:[%s0 + $0x2c0] sm:$0xff]
  %v103 = vld [vmem:[%s0 + $0x2c8] sm:$0xff]
  %v104 = vld [vmem:[%s0 + $0x2d0] sm:$0xff]
  %v105 = vld [vmem:[%s0 + $0x2d8] sm:$0xff]
  %v106 = vld [vmem:[%s0 + $0x2e0] sm:$0xff]
  %v107 = vld [vmem:[%s0 + $0x2e8] sm:$0xff]
  %v108 = vld [vmem:[%s0 + $0x2f0] sm:$0xff]
  %v109 = vld [vmem:[%s0 + $0x2f8] sm:$0xff]
  %v110 = vld [vmem:[%s0 + $0x300] sm:$0xff]
  %v111 = vld [vmem:[%s0 + $0x308] sm:$0xff]
  %v112 = vld [vmem:[%s0 + $0x310] sm:$0xff]
  %v113 = vld [vmem:[%s0 + $0x318] sm:$0xff]
  %v114 = vld [vmem:[%s0 + $0x320] sm:$0xff]
  %v115 = vld [vmem:[%s0 + $0x328] sm:$0xff]
  %v116 = vld [vmem:[%s0 + $0x330] sm:$0xff]
  %v117 = vld [vmem:[%s0 + $0x338] sm:$0xff]
  %v118 = vld [vmem:[%s0 + $0x340] sm:$0xff]
  %v119 = vld [vmem:[%s0 + $0x348] sm:$0xff]
  %v120 = vld [vmem:[%s0 + $0x350] sm:$0xff]
  %v121 = vld [vmem:[%s0 + $0x358] sm:$0xff]
  %v122 = vld [vmem:[%s0 + $0x360] sm:$0xff]
  %v123 = vld [vmem:[%s0 + $0x368] sm:$0xff]
  %v124 = vld [vmem:[%s0 + $0x370] sm:$0xff]
  %v125 = vld [vmem:[%s0 + $0x378] sm:$0xff]
  %v126 = vld [vmem:[%s0 + $0x380] sm:$0xff]
  %v127 = vld [vmem:[%s0 + $0x388] sm:$0xff]
  %v128 = vld [vmem:[%s0 + $0x390] sm:$0xff]
  %v129 = vld [vmem:[%s0 + $0x398] sm:$0xff]
  %v130 = vld [vmem:[%s0 + $0x3a0] sm:$0xff]
  %v131 = vld [vmem:[%s0 + $0x3a8] sm:$0xff]
  %v132 = vld [vmem:[%s0 + $0x3b0] sm:$0xff]
  %v133 = vld [vmem:[%s0 + $0x3b8] sm:$0xff]
  %v134 = vld [vmem:[%s0 + $0x3c0] sm:$0xff]
  %v135 = vld [vmem:[%s0 + $0x3c8] sm:$0xff]
  %v136 = vld [vmem:[%s0 + $0x3d0] sm:$0xff]
  %v137 = vld [vmem:[%s0 + $0x3d8] sm:$0xff]
  %v138 = vld [vmem:[%s0 + $0x3e0] sm:$0xff]
  %v139 = vld [vmem:[%s0 + $0x3e8] sm:$0xff]
  %v140 = vld [vmem:[%s0 + $0x3f0] sm:$0xff]
  %v141 = vld [vmem:[%s0 + $0x3f8] sm:$0xff]
  %v142 = vld [vmem:[%s0 + $0x400] sm:$0xff]
  %v143 = vld [vmem:[%s0 + $0x408] sm:$0xff]
  %v144 = vld [vmem:[%s0 + $0x410] sm:$0xff]
  %v145 = vld [vmem:[%s0 + $0x418] sm:$0xff]
  %v146 = vld [vmem:[%s0 + $0x420] sm:$0xff]
  %v147 = vld [vmem:[%s0 + $0x428] sm:$0xff]
  %v148 = vld [vmem:[%s0 + $0x430] sm:$0xff]
  %v149 = vld [vmem:[%s0 + $0x438] sm:$0xff]
  %v150 = vld [vmem:[%s0 + $0x440] sm:$0xff]
  %v151 = vld [vmem:[%s0 + $0x448] sm:$0xff]
  %v152 = vld [vmem:[%s0 + $0x450] sm:$0xff]
  %v153 = vld [vmem:[%s0 + $0x458] sm:$0xff]
  %v154 = vld [vmem:[%s0 + $0x460] sm:$0xff]
  %v155 = vld [vmem:[%s0 + $0x468] sm:$0xff]
  %v156 = vld [vmem:[%s0 + $0x470] sm:$0xff]
  %v157 = vld [vmem:[%s0 + $0x478] sm:$0xff]
  %v158 = vld [vmem:[%s0 + $0x480] sm:$0xff]
  %v159 = vld [vmem:[%s0 + $0x488] sm:$0xff]
  %v160 = vld [vmem:[%s0 + $0x490] sm:$0xff]
  %v161 = vld [vmem:[%s0 + $0x498] sm:$0xff]
  %v162 = vld [vmem:[%s0 + $0x4a0] sm:$0xff]
  %v163 = vld [vmem:[%s0 + $0x4a8] sm:$0xff]
  %v164 = vld [vmem:[%s0 + $0x4b0] sm:$0xff]
  %v165 = vld [vmem:[%s0 + $0x4b8] sm:$0xff]
  %v166 = vld [vmem:[%s0 + $0x4c0] sm:$0xff]
  %v167 = vld [vmem:[%s0 + $0x4c8] sm:$0xff]
  %v168 = vld [vmem:[%s0 + $0x4d0] sm:$0xff]
  %v169 = vld [vmem:[%s0 + $0x4d8] sm:$0xff]
  %v170 = vld [vmem:[%s0 + $0x4e0] sm:$0xff]
  %v171 = vld [vmem:[%s0 + $0x4e8] sm:$0xff]
  %v172 = vld [vmem:[%s0 + $0x4f0] sm:$0xff]
  %v173 = vld [vmem:[%s0 + $0x4f8] sm:$0xff]
  %v174 = vld [vmem:[%s0 + $0x500] sm:$0xff]
  %v175 = vld [vmem:[%s0 + $0x508] sm:$0xff]
  %v176 = vld [vmem:[%s0 + $0x510] sm:$0xff]
  %v177 = vld [vmem:[%s0 + $0x518] sm:$0xff]
  %v178 = vld [vmem:[%s0 + $0x520] sm:$0xff]
  %v179 = vld [vmem:[%s0 + $0x528] sm:$0xff]
  %v180 = vld [vmem:[%s0 + $0x530] sm:$0xff]
  %v181 = vld [vmem:[%s0 + $0x538] sm:$0xff]
  %v182 = vld [vmem:[%s0 + $0x540] sm:$0xff]
  %v183 = vld [vmem:[%s0 + $0x548] sm:$0xff]
  %v184 = vld [vmem:[%s0 + $0x550] sm:$0xff]
  %v185 = vld [vmem:[%s0 + $0x558] sm:$0xff]
  %v186 = vld [vmem:[%s0 + $0x560] sm:$0xff]
  %v187 = vld [vmem:[%s0 + $0x568] sm:$0xff]
  %v188 = vld [vmem:[%s0 + $0x570] sm:$0xff]
  %v189 = vld [vmem:[%s0 + $0x578] sm:$0xff]
  %v190 = vld [vmem:[%s0 + $0x580] sm:$0xff]
  %v191 = vld [vmem:[%s0 + $0x588] sm:$0xff]
  %v192 = vld [vmem:[%s0 + $0x590] sm:$0xff]
  %v193 = vld [vmem:[%s0 + $0x598] sm:$0xff]
  %v194 = vld [vmem:[%s0 + $0x5a0] sm:$0xff]
  %v195 = vld [vmem:[%s0 + $0x5a8] sm:$0xff]
  %v196 = vld [vmem:[%s0 + $0x5b0] sm:$0xff]
  %v197 = vld [vmem:[%s0 + $0x5b8] sm:$0xff]
  %v198 = vld [vmem:[%s0 + $0x5c0] sm:$0xff]
  %v199 = vld [vmem:[%s0 + $0x5c8] sm:$0xff]
  %v200 = vld [vmem:[%s0 + $0x5d0] sm:$0xff]
  %v201 = vld [vmem:[%s0 + $0x5d8] sm:$0xff]
  %v202 = vld [vmem:[%s0 + $0x5e0] sm:$0xff]
  %v203 = vld [vmem:[%s0 + $0x5e8] sm:$0xff]
  %v204 = vld [vmem:[%s0 + $0x5f0] sm:$0xff]
  %v205 = vld [vmem:[%s0 + $0x5f8] sm:$0xff]
  %v206 = vld [vmem:[%s0 + $0x600] sm:$0xff]
  %v207 = vld [vmem:[%s0 + $0x608] sm:$0xff]
  %v208 = vld [vmem:[%s0 + $0x610] sm:$0xff]
  %v209 = vld [vmem:[%s0 + $0x618] sm:$0xff]
  %v210 = vld [vmem:[%s0 + $0x620] sm:$0xff]
  %v211 = vld [vmem:[%s0 + $0x628] sm:$0xff]
  %v212 = vld [vmem:[%s0 + $0x630] sm:$0xff]
  %v213 = vld [vmem:[%s0 + $0x638] sm:$0xff]
  %v214 = vld [vmem:[%s0 + $0x640] sm:$0xff]
  %v215 = vld [vmem:[%s0 + $0x648] sm:$0xff]
  %v216 = vld [vmem:[%s0 + $0x650] sm:$0xff]
  %v217 = vld [vmem:[%s0 + $0x658] sm:$0xff]
  %v218 = vld [vmem:[%s0 + $0x660] sm:$0xff]
  %v219 = vld [vmem:[%s0 + $0x668] sm:$0xff]
  %v220 = vld [vmem:[%s0 + $0x670] sm:$0xff]
  %v221 = vld [vmem:[%s0 + $0x678] sm:$0xff]
  %v222 = vld [vmem:[%s0 + $0x680] sm:$0xff]
  %v223 = vld [vmem:[%s0 + $0x688] sm:$0xff]
  %v224 = vld [vmem:[%s0 + $0x690] sm:$0xff]
  %v225 = vld [vmem:[%s0 + $0x698] sm:$0xff]
  %v226 = vld [vmem:[%s0 + $0x6a0] sm:$0xff]
  %v227 = vld [vmem:[%s0 + $0x6a8] sm:$0xff]
  %v228 = vld [vmem:[%s0 + $0x6b0] sm:$0xff]
  %v229 = vld [vmem:[%s0 + $0x6b8] sm:$0xff]
  %v230 = vld [vmem:[%s0 + $0x6c0] sm:$0xff]
  %v231 = vld [vmem:[%s0 + $0x6c8] sm:$0xff]
  %v232 = vld [vmem:[%s0 + $0x6d0] sm:$0xff]
  %v233 = vld [vmem:[%s0 + $0x6d8] sm:$0xff]
  %v234 = vld [vmem:[%s0 + $0x6e0] sm:$0xff]
  %v235 = vld [vmem:[%s0 + $0x6e8] sm:$0xff]
  %v236 = vld [vmem:[%s0 + $0x6f0] sm:$0xff]
  %v237 = vld [vmem:[%s0 + $0x6f8] sm:$0xff]
  %v238 = vadd.f32 %v14, 0.0
  %v239 = vadd.f32 %v15, 0.0
  %v240 = vadd.f32 %v16, 0.0
  %v241 = vadd.f32 %v17, 0.0
  %v242 = vadd.f32 %v18, 0.0
  %v243 = vadd.f32 %v19, 0.0
  %v244 = vadd.f32 %v20, 0.0
  %v245 = vadd.f32 %v21, 0.0
  %v246 = vadd.f32 %v22, 0.0
  %v247 = vadd.f32 %v23, 0.0
  %v248 = vadd.f32 %v24, 0.0
  %v249 = vadd.f32 %v25, 0.0
  %v250 = vadd.f32 %v26, 0.0
  %v251 = vadd.f32 %v27, 0.0
  %v252 = vadd.f32 %v28, 0.0
  %v253 = vadd.f32 %v29, 0.0
  %v254 = vadd.f32 %v30, 0.0
  %v255 = vadd.f32 %v31, 0.0
  %v256 = vadd.f32 %v32, 0.0
  %v257 = vadd.f32 %v33, 0.0
  %v258 = vadd.f32 %v34, 0.0
  %v259 = vadd.f32 %v35, 0.0
  %v260 = vadd.f32 %v36, 0.0
  %v261 = vadd.f32 %v37, 0.0
  %v262 = vadd.f32 %v38, 0.0
  %v263 = vadd.f32 %v39, 0.0
  %v264 = vadd.f32 %v40, 0.0
  %v265 = vadd.f32 %v41, 0.0
  %v266 = vadd.f32 %v42, 0.0
  %v267 = vadd.f32 %v43, 0.0
  %v268 = vadd.f32 %v44, 0.0
  %v269 = vadd.f32 %v45, 0.0
  %v270 = vadd.f32 %v46, 0.0
  %v271 = vadd.f32 %v47, 0.0
  %v272 = vadd.f32 %v48, 0.0
  %v273 = vadd.f32 %v49, 0.0
  %v274 = vadd.f32 %v50, 0.0
  %v275 = vadd.f32 %v51, 0.0
  %v276 = vadd.f32 %v52, 0.0
  %v277 = vadd.f32 %v53, 0.0
  %v278 = vadd.f32 %v54, 0.0
  %v279 = vadd.f32 %v55, 0.0
  %v280 = vadd.f32 %v56, 0.0
  %v281 = vadd.f32 %v57, 0.0
  %v282 = vadd.f32 %v58, 0.0
  %v283 = vadd.f32 %v59, 0.0
  %v284 = vadd.f32 %v60, 0.0
  %v285 = vadd.f32 %v61, 0.0
  %v286 = vadd.f32 %v62, 0.0
  %v287 = vadd.f32 %v63, 0.0
  %v288 = vadd.f32 %v64, 0.0
  %v289 = vadd.f32 %v65, 0.0
  %v290 = vadd.f32 %v66, 0.0
  %v291 = vadd.f32 %v67, 0.0
  %v292 = vadd.f32 %v68, 0.0
  %v293 = vadd.f32 %v69, 0.0
  %v294 = vadd.f32 %v70, 0.0
  %v295 = vadd.f32 %v71, 0.0
  %v296 = vadd.f32 %v72, 0.0
  %v297 = vadd.f32 %v73, 0.0
  %v298 = vadd.f32 %v74, 0.0
  %v299 = vadd.f32 %v75, 0.0
  %v300 = vadd.f32 %v76, 0.0
  %v301 = vadd.f32 %v77, 0.0
  %v302 = vadd.f32 %v78, 0.0
  %v303 = vadd.f32 %v79, 0.0
  %v304 = vadd.f32 %v80, 0.0
  %v305 = vadd.f32 %v81, 0.0
  %v306 = vadd.f32 %v82, 0.0
  %v307 = vadd.f32 %v83, 0.0
  %v308 = vadd.f32 %v84, 0.0
  %v309 = vadd.f32 %v85, 0.0
  %v310 = vadd.f32 %v86, 0.0
  %v311 = vadd.f32 %v87, 0.0
  %v312 = vadd.f32 %v88, 0.0
  %v313 = vadd.f32 %v89, 0.0
  %v314 = vadd.f32 %v90, 0.0
  %v315 = vadd.f32 %v91, 0.0
  %v316 = vadd.f32 %v92, 0.0
  %v317 = vadd.f32 %v93, 0.0
  %v318 = vadd.f32 %v94, 0.0
  %v319 = vadd.f32 %v95, 0.0
  %v320 = vadd.f32 %v96, 0.0
  %v321 = vadd.f32 %v97, 0.0
  %v322 = vadd.f32 %v98, 0.0
  %v323 = vadd.f32 %v99, 0.0
  %v324 = vadd.f32 %v100, 0.0
  %v325 = vadd.f32 %v101, 0.0
  %v326 = vadd.f32 %v102, 0.0
  %v327 = vadd.f32 %v103, 0.0
  %v328 = vadd.f32 %v104, 0.0
  %v329 = vadd.f32 %v105, 0.0
  %v330 = vadd.f32 %v106, 0.0
  %v331 = vadd.f32 %v107, 0.0
  %v332 = vadd.f32 %v108, 0.0
  %v333 = vadd.f32 %v109, 0.0
  %v334 = vadd.f32 %v110, 0.0
  %v335 = vadd.f32 %v111, 0.0
  %v336 = vadd.f32 %v112, 0.0
  %v337 = vadd.f32 %v113, 0.0
  %v338 = vadd.f32 %v114, 0.0
  %v339 = vadd.f32 %v115, 0.0
  %v340 = vadd.f32 %v116, 0.0
  %v341 = vadd.f32 %v117, 0.0
  %v342 = vadd.f32 %v118, 0.0
  %v343 = vadd.f32 %v119, 0.0
  %v344 = vadd.f32 %v120, 0.0
  %v345 = vadd.f32 %v121, 0.0
  %v346 = vadd.f32 %v122, 0.0
  %v347 = vadd.f32 %v123, 0.0
  %v348 = vadd.f32 %v124, 0.0
  %v349 = vadd.f32 %v125, 0.0
  %v350 = vadd.f32 %v126, 0.0
  %v351 = vadd.f32 %v127, 0.0
  %v352 = vadd.f32 %v128, 0.0
  %v353 = vadd.f32 %v129, 0.0
  %v354 = vadd.f32 %v130, 0.0
  %v355 = vadd.f32 %v131, 0.0
  %v356 = vadd.f32 %v132, 0.0
  %v357 = vadd.f32 %v133, 0.0
  %v358 = vadd.f32 %v134, 0.0
  %v359 = vadd.f32 %v135, 0.0
  %v360 = vadd.f32 %v136, 0.0
  %v361 = vadd.f32 %v137, 0.0
  %v362 = vadd.f32 %v138, 0.0
  %v363 = vadd.f32 %v139, 0.0
  %v364 = vadd.f32 %v140, 0.0
  %v365 = vadd.f32 %v141, 0.0
  %v366 = vadd.f32 %v142, 0.0
  %v367 = vadd.f32 %v143, 0.0
  %v368 = vadd.f32 %v144, 0.0
  %v369 = vadd.f32 %v145, 0.0
  %v370 = vadd.f32 %v146, 0.0
  %v371 = vadd.f32 %v147, 0.0
  %v372 = vadd.f32 %v148, 0.0
  %v373 = vadd.f32 %v149, 0.0
  %v374 = vadd.f32 %v150, 0.0
  %v375 = vadd.f32 %v151, 0.0
  %v376 = vadd.f32 %v152, 0.0
  %v377 = vadd.f32 %v153, 0.0
  %v378 = vadd.f32 %v154, 0.0
  %v379 = vadd.f32 %v155, 0.0
  %v380 = vadd.f32 %v156, 0.0
  %v381 = vadd.f32 %v157, 0.0
  %v382 = vadd.f32 %v158, 0.0
  %v383 = vadd.f32 %v159, 0.0
  %v384 = vadd.f32 %v160, 0.0
  %v385 = vadd.f32 %v161, 0.0
  %v386 = vadd.f32 %v162, 0.0
  %v387 = vadd.f32 %v163, 0.0
  %v388 = vadd.f32 %v164, 0.0
  %v389 = vadd.f32 %v165, 0.0
  %v390 = vadd.f32 %v166, 0.0
  %v391 = vadd.f32 %v167, 0.0
  %v392 = vadd.f32 %v168, 0.0
  %v393 = vadd.f32 %v169, 0.0
  %v394 = vadd.f32 %v170, 0.0
  %v395 = vadd.f32 %v171, 0.0
  %v396 = vadd.f32 %v172, 0.0
  %v397 = vadd.f32 %v173, 0.0
  %v398 = vadd.f32 %v174, 0.0
  %v399 = vadd.f32 %v175, 0.0
  %v400 = vadd.f32 %v176, 0.0
  %v401 = vadd.f32 %v177, 0.0
  %v402 = vadd.f32 %v178, 0.0
  %v403 = vadd.f32 %v179, 0.0
  %v404 = vadd.f32 %v180, 0.0
  %v405 = vadd.f32 %v181, 0.0
  %v406 = vadd.f32 %v182, 0.0
  %v407 = vadd.f32 %v183, 0.0
  %v408 = vadd.f32 %v184, 0.0
  %v409 = vadd.f32 %v185, 0.0
  %v410 = vadd.f32 %v186, 0.0
  %v411 = vadd.f32 %v187, 0.0
  %v412 = vadd.f32 %v188, 0.0
  %v413 = vadd.f32 %v189, 0.0
  %v414 = vadd.f32 %v190, 0.0
  %v415 = vadd.f32 %v191, 0.0
  %v416 = vadd.f32 %v192, 0.0
  %v417 = vadd.f32 %v193, 0.0
  %v418 = vadd.f32 %v194, 0.0
  %v419 = vadd.f32 %v195, 0.0
  %v420 = vadd.f32 %v196, 0.0
  %v421 = vadd.f32 %v197, 0.0
  %v422 = vadd.f32 %v198, 0.0
  %v423 = vadd.f32 %v199, 0.0
  %v424 = vadd.f32 %v200, 0.0
  %v425 = vadd.f32 %v201, 0.0
  %v426 = vadd.f32 %v202, 0.0
  %v427 = vadd.f32 %v203, 0.0
  %v428 = vadd.f32 %v204, 0.0
  %v429 = vadd.f32 %v205, 0.0
  %v430 = vadd.f32 %v206, 0.0
  %v431 = vadd.f32 %v207, 0.0
  %v432 = vadd.f32 %v208, 0.0
  %v433 = vadd.f32 %v209, 0.0
  %v434 = vadd.f32 %v210, 0.0
  %v435 = vadd.f32 %v211, 0.0
  %v436 = vadd.f32 %v212, 0.0
  %v437 = vadd.f32 %v213, 0.0
  %v438 = vadd.f32 %v214, 0.0
  %v439 = vadd.f32 %v215, 0.0
  %v440 = vadd.f32 %v216, 0.0
  %v441 = vadd.f32 %v217, 0.0
  %v442 = vadd.f32 %v218, 0.0
  %v443 = vadd.f32 %v219, 0.0
  %v444 = vadd.f32 %v220, 0.0
  %v445 = vadd.f32 %v221, 0.0
  %v446 = vadd.f32 %v222, 0.0
  %v447 = vadd.f32 %v223, 0.0
  %v448 = vadd.f32 %v224, 0.0
  %v449 = vadd.f32 %v225, 0.0
  %v450 = vadd.f32 %v226, 0.0
  %v451 = vadd.f32 %v227, 0.0
  %v452 = vadd.f32 %v228, 0.0
  %v453 = vadd.f32 %v229, 0.0
  %v454 = vadd.f32 %v230, 0.0
  %v455 = vadd.f32 %v231, 0.0
  %v456 = vadd.f32 %v232, 0.0
  %v457 = vadd.f32 %v233, 0.0
  %v458 = vadd.f32 %v234, 0.0
  %v459 = vadd.f32 %v235, 0.0
  %v460 = vadd.f32 %v236, 0.0
  %v461 = vadd.f32 %v237, 0.0
  %v462 = vadd.f32 %v238, %v239
  %v463 = vadd.f32 %v462, %v240
  %v464 = vadd.f32 %v463, %v241
  %v465 = vadd.f32 %v464, %v242
  %v466 = vadd.f32 %v465, %v243
  %vm467 = vcmask 130048
  %v468 = vsel %vm467, %v244, 0.0
  %v469 = vadd.f32 %v466, %v468
  %470 = vadd.xlane.f32.xlu0 %v469
  %v471 = vpop.xlane.xlu0 %470
  %v472 = vadd.f32 %v245, %v246
  %v473 = vadd.f32 %v472, %v247
  %v474 = vadd.f32 %v473, %v248
  %v475 = vadd.f32 %v474, %v249
  %v476 = vadd.f32 %v475, %v250
  %v477 = vsel %vm467, %v251, 0.0
  %v478 = vadd.f32 %v476, %v477
  %479 = vadd.xlane.f32.xlu0 %v478
  %v480 = vpop.xlane.xlu0 %479
  %v481 = vadd.f32 %v252, %v253
  %v482 = vadd.f32 %v481, %v254
  %v483 = vadd.f32 %v482, %v255
  %v484 = vadd.f32 %v483, %v256
  %v485 = vadd.f32 %v484, %v257
  %v486 = vsel %vm467, %v258, 0.0
  %v487 = vadd.f32 %v485, %v486
  %488 = vadd.xlane.f32.xlu0 %v487
  %v489 = vpop.xlane.xlu0 %488
  %v490 = vadd.f32 %v259, %v260
  %v491 = vadd.f32 %v490, %v261
  %v492 = vadd.f32 %v491, %v262
  %v493 = vadd.f32 %v492, %v263
  %v494 = vadd.f32 %v493, %v264
  %v495 = vsel %vm467, %v265, 0.0
  %v496 = vadd.f32 %v494, %v495
  %497 = vadd.xlane.f32.xlu0 %v496
  %v498 = vpop.xlane.xlu0 %497
  %v499 = vadd.f32 %v266, %v267
  %v500 = vadd.f32 %v499, %v268
  %v501 = vadd.f32 %v500, %v269
  %v502 = vadd.f32 %v501, %v270
  %v503 = vadd.f32 %v502, %v271
  %v504 = vsel %vm467, %v272, 0.0
  %v505 = vadd.f32 %v503, %v504
  %506 = vadd.xlane.f32.xlu0 %v505
  %v507 = vpop.xlane.xlu0 %506
  %v508 = vadd.f32 %v273, %v274
  %v509 = vadd.f32 %v508, %v275
  %v510 = vadd.f32 %v509, %v276
  %v511 = vadd.f32 %v510, %v277
  %v512 = vadd.f32 %v511, %v278
  %v513 = vsel %vm467, %v279, 0.0
  %v514 = vadd.f32 %v512, %v513
  %515 = vadd.xlane.f32.xlu0 %v514
  %v516 = vpop.xlane.xlu0 %515
  %v517 = vadd.f32 %v280, %v281
  %v518 = vadd.f32 %v517, %v282
  %v519 = vadd.f32 %v518, %v283
  %v520 = vadd.f32 %v519, %v284
  %v521 = vadd.f32 %v520, %v285
  %v522 = vsel %vm467, %v286, 0.0
  %v523 = vadd.f32 %v521, %v522
  %524 = vadd.xlane.f32.xlu0 %v523
  %v525 = vpop.xlane.xlu0 %524
  %v526 = vadd.f32 %v287, %v288
  %v527 = vadd.f32 %v526, %v289
  %v528 = vadd.f32 %v527, %v290
  %v529 = vadd.f32 %v528, %v291
  %v530 = vadd.f32 %v529, %v292
  %v531 = vsel %vm467, %v293, 0.0
  %v532 = vadd.f32 %v530, %v531
  %533 = vadd.xlane.f32.xlu0 %v532
  %v534 = vpop.xlane.xlu0 %533
  %v535 = vadd.f32 %v294, %v295
  %v536 = vadd.f32 %v535, %v296
  %v537 = vadd.f32 %v536, %v297
  %v538 = vadd.f32 %v537, %v298
  %v539 = vadd.f32 %v538, %v299
  %v540 = vsel %vm467, %v300, 0.0
  %v541 = vadd.f32 %v539, %v540
  %542 = vadd.xlane.f32.xlu0 %v541
  %v543 = vpop.xlane.xlu0 %542
  %v544 = vadd.f32 %v301, %v302
  %v545 = vadd.f32 %v544, %v303
  %v546 = vadd.f32 %v545, %v304
  %v547 = vadd.f32 %v546, %v305
  %v548 = vadd.f32 %v547, %v306
  %v549 = vsel %vm467, %v307, 0.0
  %v550 = vadd.f32 %v548, %v549
  %551 = vadd.xlane.f32.xlu0 %v550
  %v552 = vpop.xlane.xlu0 %551
  %v553 = vadd.f32 %v308, %v309
  %v554 = vadd.f32 %v553, %v310
  %v555 = vadd.f32 %v554, %v311
  %v556 = vadd.f32 %v555, %v312
  %v557 = vadd.f32 %v556, %v313
  %v558 = vsel %vm467, %v314, 0.0
  %v559 = vadd.f32 %v557, %v558
  %560 = vadd.xlane.f32.xlu0 %v559
  %v561 = vpop.xlane.xlu0 %560
  %v562 = vadd.f32 %v315, %v316
  %v563 = vadd.f32 %v562, %v317
  %v564 = vadd.f32 %v563, %v318
  %v565 = vadd.f32 %v564, %v319
  %v566 = vadd.f32 %v565, %v320
  %v567 = vsel %vm467, %v321, 0.0
  %v568 = vadd.f32 %v566, %v567
  %569 = vadd.xlane.f32.xlu0 %v568
  %v570 = vpop.xlane.xlu0 %569
  %v571 = vadd.f32 %v322, %v323
  %v572 = vadd.f32 %v571, %v324
  %v573 = vadd.f32 %v572, %v325
  %v574 = vadd.f32 %v573, %v326
  %v575 = vadd.f32 %v574, %v327
  %v576 = vsel %vm467, %v328, 0.0
  %v577 = vadd.f32 %v575, %v576
  %578 = vadd.xlane.f32.xlu0 %v577
  %v579 = vpop.xlane.xlu0 %578
  %v580 = vadd.f32 %v329, %v330
  %v581 = vadd.f32 %v580, %v331
  %v582 = vadd.f32 %v581, %v332
  %v583 = vadd.f32 %v582, %v333
  %v584 = vadd.f32 %v583, %v334
  %v585 = vsel %vm467, %v335, 0.0
  %v586 = vadd.f32 %v584, %v585
  %587 = vadd.xlane.f32.xlu0 %v586
  %v588 = vpop.xlane.xlu0 %587
  %v589 = vadd.f32 %v336, %v337
  %v590 = vadd.f32 %v589, %v338
  %v591 = vadd.f32 %v590, %v339
  %v592 = vadd.f32 %v591, %v340
  %v593 = vadd.f32 %v592, %v341
  %v594 = vsel %vm467, %v342, 0.0
  %v595 = vadd.f32 %v593, %v594
  %596 = vadd.xlane.f32.xlu0 %v595
  %v597 = vpop.xlane.xlu0 %596
  %v598 = vadd.f32 %v343, %v344
  %v599 = vadd.f32 %v598, %v345
  %v600 = vadd.f32 %v599, %v346
  %v601 = vadd.f32 %v600, %v347
  %v602 = vadd.f32 %v601, %v348
  %v603 = vsel %vm467, %v349, 0.0
  %v604 = vadd.f32 %v602, %v603
  %605 = vadd.xlane.f32.xlu0 %v604
  %v606 = vpop.xlane.xlu0 %605
  %v607 = vadd.f32 %v350, %v351
  %v608 = vadd.f32 %v607, %v352
  %v609 = vadd.f32 %v608, %v353
  %v610 = vadd.f32 %v609, %v354
  %v611 = vadd.f32 %v610, %v355
  %v612 = vsel %vm467, %v356, 0.0
  %v613 = vadd.f32 %v611, %v612
  %614 = vadd.xlane.f32.xlu0 %v613
  %v615 = vpop.xlane.xlu0 %614
  %v616 = vadd.f32 %v357, %v358
  %v617 = vadd.f32 %v616, %v359
  %v618 = vadd.f32 %v617, %v360
  %v619 = vadd.f32 %v618, %v361
  %v620 = vadd.f32 %v619, %v362
  %v621 = vsel %vm467, %v363, 0.0
  %v622 = vadd.f32 %v620, %v621
  %623 = vadd.xlane.f32.xlu0 %v622
  %v624 = vpop.xlane.xlu0 %623
  %v625 = vadd.f32 %v364, %v365
  %v626 = vadd.f32 %v625, %v366
  %v627 = vadd.f32 %v626, %v367
  %v628 = vadd.f32 %v627, %v368
  %v629 = vadd.f32 %v628, %v369
  %v630 = vsel %vm467, %v370, 0.0
  %v631 = vadd.f32 %v629, %v630
  %632 = vadd.xlane.f32.xlu0 %v631
  %v633 = vpop.xlane.xlu0 %632
  %v634 = vadd.f32 %v371, %v372
  %v635 = vadd.f32 %v634, %v373
  %v636 = vadd.f32 %v635, %v374
  %v637 = vadd.f32 %v636, %v375
  %v638 = vadd.f32 %v637, %v376
  %v639 = vsel %vm467, %v377, 0.0
  %v640 = vadd.f32 %v638, %v639
  %641 = vadd.xlane.f32.xlu0 %v640
  %v642 = vpop.xlane.xlu0 %641
  %v643 = vadd.f32 %v378, %v379
  %v644 = vadd.f32 %v643, %v380
  %v645 = vadd.f32 %v644, %v381
  %v646 = vadd.f32 %v645, %v382
  %v647 = vadd.f32 %v646, %v383
  %v648 = vsel %vm467, %v384, 0.0
  %v649 = vadd.f32 %v647, %v648
  %650 = vadd.xlane.f32.xlu0 %v649
  %v651 = vpop.xlane.xlu0 %650
  %v652 = vadd.f32 %v385, %v386
  %v653 = vadd.f32 %v652, %v387
  %v654 = vadd.f32 %v653, %v388
  %v655 = vadd.f32 %v654, %v389
  %v656 = vadd.f32 %v655, %v390
  %v657 = vsel %vm467, %v391, 0.0
  %v658 = vadd.f32 %v656, %v657
  %659 = vadd.xlane.f32.xlu0 %v658
  %v660 = vpop.xlane.xlu0 %659
  %v661 = vadd.f32 %v392, %v393
  %v662 = vadd.f32 %v661, %v394
  %v663 = vadd.f32 %v662, %v395
  %v664 = vadd.f32 %v663, %v396
  %v665 = vadd.f32 %v664, %v397
  %v666 = vsel %vm467, %v398, 0.0
  %v667 = vadd.f32 %v665, %v666
  %668 = vadd.xlane.f32.xlu0 %v667
  %v669 = vpop.xlane.xlu0 %668
  %v670 = vadd.f32 %v399, %v400
  %v671 = vadd.f32 %v670, %v401
  %v672 = vadd.f32 %v671, %v402
  %v673 = vadd.f32 %v672, %v403
  %v674 = vadd.f32 %v673, %v404
  %v675 = vsel %vm467, %v405, 0.0
  %v676 = vadd.f32 %v674, %v675
  %677 = vadd.xlane.f32.xlu0 %v676
  %v678 = vpop.xlane.xlu0 %677
  %v679 = vadd.f32 %v406, %v407
  %v680 = vadd.f32 %v679, %v408
  %v681 = vadd.f32 %v680, %v409
  %v682 = vadd.f32 %v681, %v410
  %v683 = vadd.f32 %v682, %v411
  %v684 = vsel %vm467, %v412, 0.0
  %v685 = vadd.f32 %v683, %v684
  %686 = vadd.xlane.f32.xlu0 %v685
  %v687 = vpop.xlane.xlu0 %686
  %v688 = vadd.f32 %v413, %v414
  %v689 = vadd.f32 %v688, %v415
  %v690 = vadd.f32 %v689, %v416
  %v691 = vadd.f32 %v690, %v417
  %v692 = vadd.f32 %v691, %v418
  %v693 = vsel %vm467, %v419, 0.0
  %v694 = vadd.f32 %v692, %v693
  %695 = vadd.xlane.f32.xlu0 %v694
  %v696 = vpop.xlane.xlu0 %695
  %v697 = vadd.f32 %v420, %v421
  %v698 = vadd.f32 %v697, %v422
  %v699 = vadd.f32 %v698, %v423
  %v700 = vadd.f32 %v699, %v424
  %v701 = vadd.f32 %v700, %v425
  %v702 = vsel %vm467, %v426, 0.0
  %v703 = vadd.f32 %v701, %v702
  %704 = vadd.xlane.f32.xlu0 %v703
  %v705 = vpop.xlane.xlu0 %704
  %v706 = vadd.f32 %v427, %v428
  %v707 = vadd.f32 %v706, %v429
  %v708 = vadd.f32 %v707, %v430
  %v709 = vadd.f32 %v708, %v431
  %v710 = vadd.f32 %v709, %v432
  %v711 = vsel %vm467, %v433, 0.0
  %v712 = vadd.f32 %v710, %v711
  %713 = vadd.xlane.f32.xlu0 %v712
  %v714 = vpop.xlane.xlu0 %713
  %v715 = vadd.f32 %v434, %v435
  %v716 = vadd.f32 %v715, %v436
  %v717 = vadd.f32 %v716, %v437
  %v718 = vadd.f32 %v717, %v438
  %v719 = vadd.f32 %v718, %v439
  %v720 = vsel %vm467, %v440, 0.0
  %v721 = vadd.f32 %v719, %v720
  %722 = vadd.xlane.f32.xlu0 %v721
  %v723 = vpop.xlane.xlu0 %722
  %v724 = vadd.f32 %v441, %v442
  %v725 = vadd.f32 %v724, %v443
  %v726 = vadd.f32 %v725, %v444
  %v727 = vadd.f32 %v726, %v445
  %v728 = vadd.f32 %v727, %v446
  %v729 = vsel %vm467, %v447, 0.0
  %v730 = vadd.f32 %v728, %v729
  %731 = vadd.xlane.f32.xlu0 %v730
  %v732 = vpop.xlane.xlu0 %731
  %v733 = vadd.f32 %v448, %v449
  %v734 = vadd.f32 %v733, %v450
  %v735 = vadd.f32 %v734, %v451
  %v736 = vadd.f32 %v735, %v452
  %v737 = vadd.f32 %v736, %v453
  %v738 = vsel %vm467, %v454, 0.0
  %v739 = vadd.f32 %v737, %v738
  %740 = vadd.xlane.f32.xlu0 %v739
  %v741 = vpop.xlane.xlu0 %740
  %v742 = vadd.f32 %v455, %v456
  %v743 = vadd.f32 %v742, %v457
  %v744 = vadd.f32 %v743, %v458
  %v745 = vadd.f32 %v744, %v459
  %v746 = vadd.f32 %v745, %v460
  %v747 = vsel %vm467, %v461, 0.0
  %v748 = vadd.f32 %v746, %v747
  %749 = vadd.xlane.f32.xlu0 %v748
  %v750 = vpop.xlane.xlu0 %749
  %v751 = vmul.f32 %v471, 0.0012755102
  %v752 = vmul.f32 %v480, 0.0012755102
  %v753 = vmul.f32 %v489, 0.0012755102
  %v754 = vmul.f32 %v498, 0.0012755102
  %v755 = vmul.f32 %v507, 0.0012755102
  %v756 = vmul.f32 %v516, 0.0012755102
  %v757 = vmul.f32 %v525, 0.0012755102
  %v758 = vmul.f32 %v534, 0.0012755102
  %v759 = vmul.f32 %v543, 0.0012755102
  %v760 = vmul.f32 %v552, 0.0012755102
  %v761 = vmul.f32 %v561, 0.0012755102
  %v762 = vmul.f32 %v570, 0.0012755102
  %v763 = vmul.f32 %v579, 0.0012755102
  %v764 = vmul.f32 %v588, 0.0012755102
  %v765 = vmul.f32 %v597, 0.0012755102
  %v766 = vmul.f32 %v606, 0.0012755102
  %v767 = vmul.f32 %v615, 0.0012755102
  %v768 = vmul.f32 %v624, 0.0012755102
  %v769 = vmul.f32 %v633, 0.0012755102
  %v770 = vmul.f32 %v642, 0.0012755102
  %v771 = vmul.f32 %v651, 0.0012755102
  %v772 = vmul.f32 %v660, 0.0012755102
  %v773 = vmul.f32 %v669, 0.0012755102
  %v774 = vmul.f32 %v678, 0.0012755102
  %v775 = vmul.f32 %v687, 0.0012755102
  %v776 = vmul.f32 %v696, 0.0012755102
  %v777 = vmul.f32 %v705, 0.0012755102
  %v778 = vmul.f32 %v714, 0.0012755102
  %v779 = vmul.f32 %v723, 0.0012755102
  %v780 = vmul.f32 %v732, 0.0012755102
  %v781 = vmul.f32 %v741, 0.0012755102
  %v782 = vmul.f32 %v750, 0.0012755102
  %v783 = vsub.f32 %v14, %v751
  %v784 = vsub.f32 %v15, %v751
  %v785 = vsub.f32 %v16, %v751
  %v786 = vsub.f32 %v17, %v751
  %v787 = vsub.f32 %v18, %v751
  %v788 = vsub.f32 %v19, %v751
  %v789 = vsub.f32 %v20, %v751
  %v790 = vsub.f32 %v21, %v752
  %v791 = vsub.f32 %v22, %v752
  %v792 = vsub.f32 %v23, %v752
  %v793 = vsub.f32 %v24, %v752
  %v794 = vsub.f32 %v25, %v752
  %v795 = vsub.f32 %v26, %v752
  %v796 = vsub.f32 %v27, %v752
  %v797 = vsub.f32 %v28, %v753
  %v798 = vsub.f32 %v29, %v753
  %v799 = vsub.f32 %v30, %v753
  %v800 = vsub.f32 %v31, %v753
  %v801 = vsub.f32 %v32, %v753
  %v802 = vsub.f32 %v33, %v753
  %v803 = vsub.f32 %v34, %v753
  %v804 = vsub.f32 %v35, %v754
  %v805 = vsub.f32 %v36, %v754
  %v806 = vsub.f32 %v37, %v754
  %v807 = vsub.f32 %v38, %v754
  %v808 = vsub.f32 %v39, %v754
  %v809 = vsub.f32 %v40, %v754
  %v810 = vsub.f32 %v41, %v754
  %v811 = vsub.f32 %v42, %v755
  %v812 = vsub.f32 %v43, %v755
  %v813 = vsub.f32 %v44, %v755
  %v814 = vsub.f32 %v45, %v755
  %v815 = vsub.f32 %v46, %v755
  %v816 = vsub.f32 %v47, %v755
  %v817 = vsub.f32 %v48, %v755
  %v818 = vsub.f32 %v49, %v756
  %v819 = vsub.f32 %v50, %v756
  %v820 = vsub.f32 %v51, %v756
  %v821 = vsub.f32 %v52, %v756
  %v822 = vsub.f32 %v53, %v756
  %v823 = vsub.f32 %v54, %v756
  %v824 = vsub.f32 %v55, %v756
  %v825 = vsub.f32 %v56, %v757
  %v826 = vsub.f32 %v57, %v757
  %v827 = vsub.f32 %v58, %v757
  %v828 = vsub.f32 %v59, %v757
  %v829 = vsub.f32 %v60, %v757
  %v830 = vsub.f32 %v61, %v757
  %v831 = vsub.f32 %v62, %v757
  %v832 = vsub.f32 %v63, %v758
  %v833 = vsub.f32 %v64, %v758
  %v834 = vsub.f32 %v65, %v758
  %v835 = vsub.f32 %v66, %v758
  %v836 = vsub.f32 %v67, %v758
  %v837 = vsub.f32 %v68, %v758
  %v838 = vsub.f32 %v69, %v758
  %v839 = vsub.f32 %v70, %v759
  %v840 = vsub.f32 %v71, %v759
  %v841 = vsub.f32 %v72, %v759
  %v842 = vsub.f32 %v73, %v759
  %v843 = vsub.f32 %v74, %v759
  %v844 = vsub.f32 %v75, %v759
  %v845 = vsub.f32 %v76, %v759
  %v846 = vsub.f32 %v77, %v760
  %v847 = vsub.f32 %v78, %v760
  %v848 = vsub.f32 %v79, %v760
  %v849 = vsub.f32 %v80, %v760
  %v850 = vsub.f32 %v81, %v760
  %v851 = vsub.f32 %v82, %v760
  %v852 = vsub.f32 %v83, %v760
  %v853 = vsub.f32 %v84, %v761
  %v854 = vsub.f32 %v85, %v761
  %v855 = vsub.f32 %v86, %v761
  %v856 = vsub.f32 %v87, %v761
  %v857 = vsub.f32 %v88, %v761
  %v858 = vsub.f32 %v89, %v761
  %v859 = vsub.f32 %v90, %v761
  %v860 = vsub.f32 %v91, %v762
  %v861 = vsub.f32 %v92, %v762
  %v862 = vsub.f32 %v93, %v762
  %v863 = vsub.f32 %v94, %v762
  %v864 = vsub.f32 %v95, %v762
  %v865 = vsub.f32 %v96, %v762
  %v866 = vsub.f32 %v97, %v762
  %v867 = vsub.f32 %v98, %v763
  %v868 = vsub.f32 %v99, %v763
  %v869 = vsub.f32 %v100, %v763
  %v870 = vsub.f32 %v101, %v763
  %v871 = vsub.f32 %v102, %v763
  %v872 = vsub.f32 %v103, %v763
  %v873 = vsub.f32 %v104, %v763
  %v874 = vsub.f32 %v105, %v764
  %v875 = vsub.f32 %v106, %v764
  %v876 = vsub.f32 %v107, %v764
  %v877 = vsub.f32 %v108, %v764
  %v878 = vsub.f32 %v109, %v764
  %v879 = vsub.f32 %v110, %v764
  %v880 = vsub.f32 %v111, %v764
  %v881 = vsub.f32 %v112, %v765
  %v882 = vsub.f32 %v113, %v765
  %v883 = vsub.f32 %v114, %v765
  %v884 = vsub.f32 %v115, %v765
  %v885 = vsub.f32 %v116, %v765
  %v886 = vsub.f32 %v117, %v765
  %v887 = vsub.f32 %v118, %v765
  %v888 = vsub.f32 %v119, %v766
  %v889 = vsub.f32 %v120, %v766
  %v890 = vsub.f32 %v121, %v766
  %v891 = vsub.f32 %v122, %v766
  %v892 = vsub.f32 %v123, %v766
  %v893 = vsub.f32 %v124, %v766
  %v894 = vsub.f32 %v125, %v766
  %v895 = vsub.f32 %v126, %v767
  %v896 = vsub.f32 %v127, %v767
  %v897 = vsub.f32 %v128, %v767
  %v898 = vsub.f32 %v129, %v767
  %v899 = vsub.f32 %v130, %v767
  %v900 = vsub.f32 %v131, %v767
  %v901 = vsub.f32 %v132, %v767
  %v902 = vsub.f32 %v133, %v768
  %v903 = vsub.f32 %v134, %v768
  %v904 = vsub.f32 %v135, %v768
  %v905 = vsub.f32 %v136, %v768
  %v906 = vsub.f32 %v137, %v768
  %v907 = vsub.f32 %v138, %v768
  %v908 = vsub.f32 %v139, %v768
  %v909 = vsub.f32 %v140, %v769
  %v910 = vsub.f32 %v141, %v769
  %v911 = vsub.f32 %v142, %v769
  %v912 = vsub.f32 %v143, %v769
  %v913 = vsub.f32 %v144, %v769
  %v914 = vsub.f32 %v145, %v769
  %v915 = vsub.f32 %v146, %v769
  %v916 = vsub.f32 %v147, %v770
  %v917 = vsub.f32 %v148, %v770
  %v918 = vsub.f32 %v149, %v770
  %v919 = vsub.f32 %v150, %v770
  %v920 = vsub.f32 %v151, %v770
  %v921 = vsub.f32 %v152, %v770
  %v922 = vsub.f32 %v153, %v770
  %v923 = vsub.f32 %v154, %v771
  %v924 = vsub.f32 %v155, %v771
  %v925 = vsub.f32 %v156, %v771
  %v926 = vsub.f32 %v157, %v771
  %v927 = vsub.f32 %v158, %v771
  %v928 = vsub.f32 %v159, %v771
  %v929 = vsub.f32 %v160, %v771
  %v930 = vsub.f32 %v161, %v772
  %v931 = vsub.f32 %v162, %v772
  %v932 = vsub.f32 %v163, %v772
  %v933 = vsub.f32 %v164, %v772
  %v934 = vsub.f32 %v165, %v772
  %v935 = vsub.f32 %v166, %v772
  %v936 = vsub.f32 %v167, %v772
  %v937 = vsub.f32 %v168, %v773
  %v938 = vsub.f32 %v169, %v773
  %v939 = vsub.f32 %v170, %v773
  %v940 = vsub.f32 %v171, %v773
  %v941 = vsub.f32 %v172, %v773
  %v942 = vsub.f32 %v173, %v773
  %v943 = vsub.f32 %v174, %v773
  %v944 = vsub.f32 %v175, %v774
  %v945 = vsub.f32 %v176, %v774
  %v946 = vsub.f32 %v177, %v774
  %v947 = vsub.f32 %v178, %v774
  %v948 = vsub.f32 %v179, %v774
  %v949 = vsub.f32 %v180, %v774
  %v950 = vsub.f32 %v181, %v774
  %v951 = vsub.f32 %v182, %v775
  %v952 = vsub.f32 %v183, %v775
  %v953 = vsub.f32 %v184, %v775
  %v954 = vsub.f32 %v185, %v775
  %v955 = vsub.f32 %v186, %v775
  %v956 = vsub.f32 %v187, %v775
  %v957 = vsub.f32 %v188, %v775
  %v958 = vsub.f32 %v189, %v776
  %v959 = vsub.f32 %v190, %v776
  %v960 = vsub.f32 %v191, %v776
  %v961 = vsub.f32 %v192, %v776
  %v962 = vsub.f32 %v193, %v776
  %v963 = vsub.f32 %v194, %v776
  %v964 = vsub.f32 %v195, %v776
  %v965 = vsub.f32 %v196, %v777
  %v966 = vsub.f32 %v197, %v777
  %v967 = vsub.f32 %v198, %v777
  %v968 = vsub.f32 %v199, %v777
  %v969 = vsub.f32 %v200, %v777
  %v970 = vsub.f32 %v201, %v777
  %v971 = vsub.f32 %v202, %v777
  %v972 = vsub.f32 %v203, %v778
  %v973 = vsub.f32 %v204, %v778
  %v974 = vsub.f32 %v205, %v778
  %v975 = vsub.f32 %v206, %v778
  %v976 = vsub.f32 %v207, %v778
  %v977 = vsub.f32 %v208, %v778
  %v978 = vsub.f32 %v209, %v778
  %v979 = vsub.f32 %v210, %v779
  %v980 = vsub.f32 %v211, %v779
  %v981 = vsub.f32 %v212, %v779
  %v982 = vsub.f32 %v213, %v779
  %v983 = vsub.f32 %v214, %v779
  %v984 = vsub.f32 %v215, %v779
  %v985 = vsub.f32 %v216, %v779
  %v986 = vsub.f32 %v217, %v780
  %v987 = vsub.f32 %v218, %v780
  %v988 = vsub.f32 %v219, %v780
  %v989 = vsub.f32 %v220, %v780
  %v990 = vsub.f32 %v221, %v780
  %v991 = vsub.f32 %v222, %v780
  %v992 = vsub.f32 %v223, %v780
  %v993 = vsub.f32 %v224, %v781
  %v994 = vsub.f32 %v225, %v781
  %v995 = vsub.f32 %v226, %v781
  %v996 = vsub.f32 %v227, %v781
  %v997 = vsub.f32 %v228, %v781
  %v998 = vsub.f32 %v229, %v781
  %v999 = vsub.f32 %v230, %v781
  %v1000 = vsub.f32 %v231, %v782
  %v1001 = vsub.f32 %v232, %v782
  %v1002 = vsub.f32 %v233, %v782
  %v1003 = vsub.f32 %v234, %v782
  %v1004 = vsub.f32 %v235, %v782
  %v1005 = vsub.f32 %v236, %v782
  %v1006 = vsub.f32 %v237, %v782
  %v1007 = vmul.f32 %v783, %v783
  %v1008 = vmul.f32 %v784, %v784
  %v1009 = vmul.f32 %v785, %v785
  %v1010 = vmul.f32 %v786, %v786
  %v1011 = vmul.f32 %v787, %v787
  %v1012 = vmul.f32 %v788, %v788
  %v1013 = vmul.f32 %v789, %v789
  %v1014 = vmul.f32 %v790, %v790
  %v1015 = vmul.f32 %v791, %v791
  %v1016 = vmul.f32 %v792, %v792
  %v1017 = vmul.f32 %v793, %v793
  %v1018 = vmul.f32 %v794, %v794
  %v1019 = vmul.f32 %v795, %v795
  %v1020 = vmul.f32 %v796, %v796
  %v1021 = vmul.f32 %v797, %v797
  %v1022 = vmul.f32 %v798, %v798
  %v1023 = vmul.f32 %v799, %v799
  %v1024 = vmul.f32 %v800, %v800
  %v1025 = vmul.f32 %v801, %v801
  %v1026 = vmul.f32 %v802, %v802
  %v1027 = vmul.f32 %v803, %v803
  %v1028 = vmul.f32 %v804, %v804
  %v1029 = vmul.f32 %v805, %v805
  %v1030 = vmul.f32 %v806, %v806
  %v1031 = vmul.f32 %v807, %v807
  %v1032 = vmul.f32 %v808, %v808
  %v1033 = vmul.f32 %v809, %v809
  %v1034 = vmul.f32 %v810, %v810
  %v1035 = vmul.f32 %v811, %v811
  %v1036 = vmul.f32 %v812, %v812
  %v1037 = vmul.f32 %v813, %v813
  %v1038 = vmul.f32 %v814, %v814
  %v1039 = vmul.f32 %v815, %v815
  %v1040 = vmul.f32 %v816, %v816
  %v1041 = vmul.f32 %v817, %v817
  %v1042 = vmul.f32 %v818, %v818
  %v1043 = vmul.f32 %v819, %v819
  %v1044 = vmul.f32 %v820, %v820
  %v1045 = vmul.f32 %v821, %v821
  %v1046 = vmul.f32 %v822, %v822
  %v1047 = vmul.f32 %v823, %v823
  %v1048 = vmul.f32 %v824, %v824
  %v1049 = vmul.f32 %v825, %v825
  %v1050 = vmul.f32 %v826, %v826
  %v1051 = vmul.f32 %v827, %v827
  %v1052 = vmul.f32 %v828, %v828
  %v1053 = vmul.f32 %v829, %v829
  %v1054 = vmul.f32 %v830, %v830
  %v1055 = vmul.f32 %v831, %v831
  %v1056 = vmul.f32 %v832, %v832
  %v1057 = vmul.f32 %v833, %v833
  %v1058 = vmul.f32 %v834, %v834
  %v1059 = vmul.f32 %v835, %v835
  %v1060 = vmul.f32 %v836, %v836
  %v1061 = vmul.f32 %v837, %v837
  %v1062 = vmul.f32 %v838, %v838
  %v1063 = vmul.f32 %v839, %v839
  %v1064 = vmul.f32 %v840, %v840
  %v1065 = vmul.f32 %v841, %v841
  %v1066 = vmul.f32 %v842, %v842
  %v1067 = vmul.f32 %v843, %v843
  %v1068 = vmul.f32 %v844, %v844
  %v1069 = vmul.f32 %v845, %v845
  %v1070 = vmul.f32 %v846, %v846
  %v1071 = vmul.f32 %v847, %v847
  %v1072 = vmul.f32 %v848, %v848
  %v1073 = vmul.f32 %v849, %v849
  %v1074 = vmul.f32 %v850, %v850
  %v1075 = vmul.f32 %v851, %v851
  %v1076 = vmul.f32 %v852, %v852
  %v1077 = vmul.f32 %v853, %v853
  %v1078 = vmul.f32 %v854, %v854
  %v1079 = vmul.f32 %v855, %v855
  %v1080 = vmul.f32 %v856, %v856
  %v1081 = vmul.f32 %v857, %v857
  %v1082 = vmul.f32 %v858, %v858
  %v1083 = vmul.f32 %v859, %v859
  %v1084 = vmul.f32 %v860, %v860
  %v1085 = vmul.f32 %v861, %v861
  %v1086 = vmul.f32 %v862, %v862
  %v1087 = vmul.f32 %v863, %v863
  %v1088 = vmul.f32 %v864, %v864
  %v1089 = vmul.f32 %v865, %v865
  %v1090 = vmul.f32 %v866, %v866
  %v1091 = vmul.f32 %v867, %v867
  %v1092 = vmul.f32 %v868, %v868
  %v1093 = vmul.f32 %v869, %v869
  %v1094 = vmul.f32 %v870, %v870
  %v1095 = vmul.f32 %v871, %v871
  %v1096 = vmul.f32 %v872, %v872
  %v1097 = vmul.f32 %v873, %v873
  %v1098 = vmul.f32 %v874, %v874
  %v1099 = vmul.f32 %v875, %v875
  %v1100 = vmul.f32 %v876, %v876
  %v1101 = vmul.f32 %v877, %v877
  %v1102 = vmul.f32 %v878, %v878
  %v1103 = vmul.f32 %v879, %v879
  %v1104 = vmul.f32 %v880, %v880
  %v1105 = vmul.f32 %v881, %v881
  %v1106 = vmul.f32 %v882, %v882
  %v1107 = vmul.f32 %v883, %v883
  %v1108 = vmul.f32 %v884, %v884
  %v1109 = vmul.f32 %v885, %v885
  %v1110 = vmul.f32 %v886, %v886
  %v1111 = vmul.f32 %v887, %v887
  %v1112 = vmul.f32 %v888, %v888
  %v1113 = vmul.f32 %v889, %v889
  %v1114 = vmul.f32 %v890, %v890
  %v1115 = vmul.f32 %v891, %v891
  %v1116 = vmul.f32 %v892, %v892
  %v1117 = vmul.f32 %v893, %v893
  %v1118 = vmul.f32 %v894, %v894
  %v1119 = vmul.f32 %v895, %v895
  %v1120 = vmul.f32 %v896, %v896
  %v1121 = vmul.f32 %v897, %v897
  %v1122 = vmul.f32 %v898, %v898
  %v1123 = vmul.f32 %v899, %v899
  %v1124 = vmul.f32 %v900, %v900
  %v1125 = vmul.f32 %v901, %v901
  %v1126 = vmul.f32 %v902, %v902
  %v1127 = vmul.f32 %v903, %v903
  %v1128 = vmul.f32 %v904, %v904
  %v1129 = vmul.f32 %v905, %v905
  %v1130 = vmul.f32 %v906, %v906
  %v1131 = vmul.f32 %v907, %v907
  %v1132 = vmul.f32 %v908, %v908
  %v1133 = vmul.f32 %v909, %v909
  %v1134 = vmul.f32 %v910, %v910
  %v1135 = vmul.f32 %v911, %v911
  %v1136 = vmul.f32 %v912, %v912
  %v1137 = vmul.f32 %v913, %v913
  %v1138 = vmul.f32 %v914, %v914
  %v1139 = vmul.f32 %v915, %v915
  %v1140 = vmul.f32 %v916, %v916
  %v1141 = vmul.f32 %v917, %v917
  %v1142 = vmul.f32 %v918, %v918
  %v1143 = vmul.f32 %v919, %v919
  %v1144 = vmul.f32 %v920, %v920
  %v1145 = vmul.f32 %v921, %v921
  %v1146 = vmul.f32 %v922, %v922
  %v1147 = vmul.f32 %v923, %v923
  %v1148 = vmul.f32 %v924, %v924
  %v1149 = vmul.f32 %v925, %v925
  %v1150 = vmul.f32 %v926, %v926
  %v1151 = vmul.f32 %v927, %v927
  %v1152 = vmul.f32 %v928, %v928
  %v1153 = vmul.f32 %v929, %v929
  %v1154 = vmul.f32 %v930, %v930
  %v1155 = vmul.f32 %v931, %v931
  %v1156 = vmul.f32 %v932, %v932
  %v1157 = vmul.f32 %v933, %v933
  %v1158 = vmul.f32 %v934, %v934
  %v1159 = vmul.f32 %v935, %v935
  %v1160 = vmul.f32 %v936, %v936
  %v1161 = vmul.f32 %v937, %v937
  %v1162 = vmul.f32 %v938, %v938
  %v1163 = vmul.f32 %v939, %v939
  %v1164 = vmul.f32 %v940, %v940
  %v1165 = vmul.f32 %v941, %v941
  %v1166 = vmul.f32 %v942, %v942
  %v1167 = vmul.f32 %v943, %v943
  %v1168 = vmul.f32 %v944, %v944
  %v1169 = vmul.f32 %v945, %v945
  %v1170 = vmul.f32 %v946, %v946
  %v1171 = vmul.f32 %v947, %v947
  %v1172 = vmul.f32 %v948, %v948
  %v1173 = vmul.f32 %v949, %v949
  %v1174 = vmul.f32 %v950, %v950
  %v1175 = vmul.f32 %v951, %v951
  %v1176 = vmul.f32 %v952, %v952
  %v1177 = vmul.f32 %v953, %v953
  %v1178 = vmul.f32 %v954, %v954
  %v1179 = vmul.f32 %v955, %v955
  %v1180 = vmul.f32 %v956, %v956
  %v1181 = vmul.f32 %v957, %v957
  %v1182 = vmul.f32 %v958, %v958
  %v1183 = vmul.f32 %v959, %v959
  %v1184 = vmul.f32 %v960, %v960
  %v1185 = vmul.f32 %v961, %v961
  %v1186 = vmul.f32 %v962, %v962
  %v1187 = vmul.f32 %v963, %v963
  %v1188 = vmul.f32 %v964, %v964
  %v1189 = vmul.f32 %v965, %v965
  %v1190 = vmul.f32 %v966, %v966
  %v1191 = vmul.f32 %v967, %v967
  %v1192 = vmul.f32 %v968, %v968
  %v1193 = vmul.f32 %v969, %v969
  %v1194 = vmul.f32 %v970, %v970
  %v1195 = vmul.f32 %v971, %v971
  %v1196 = vmul.f32 %v972, %v972
  %v1197 = vmul.f32 %v973, %v973
  %v1198 = vmul.f32 %v974, %v974
  %v1199 = vmul.f32 %v975, %v975
  %v1200 = vmul.f32 %v976, %v976
  %v1201 = vmul.f32 %v977, %v977
  %v1202 = vmul.f32 %v978, %v978
  %v1203 = vmul.f32 %v979, %v979
  %v1204 = vmul.f32 %v980, %v980
  %v1205 = vmul.f32 %v981, %v981
  %v1206 = vmul.f32 %v982, %v982
  %v1207 = vmul.f32 %v983, %v983
  %v1208 = vmul.f32 %v984, %v984
  %v1209 = vmul.f32 %v985, %v985
  %v1210 = vmul.f32 %v986, %v986
  %v1211 = vmul.f32 %v987, %v987
  %v1212 = vmul.f32 %v988, %v988
  %v1213 = vmul.f32 %v989, %v989
  %v1214 = vmul.f32 %v990, %v990
  %v1215 = vmul.f32 %v991, %v991
  %v1216 = vmul.f32 %v992, %v992
  %v1217 = vmul.f32 %v993, %v993
  %v1218 = vmul.f32 %v994, %v994
  %v1219 = vmul.f32 %v995, %v995
  %v1220 = vmul.f32 %v996, %v996
  %v1221 = vmul.f32 %v997, %v997
  %v1222 = vmul.f32 %v998, %v998
  %v1223 = vmul.f32 %v999, %v999
  %v1224 = vmul.f32 %v1000, %v1000
  %v1225 = vmul.f32 %v1001, %v1001
  %v1226 = vmul.f32 %v1002, %v1002
  %v1227 = vmul.f32 %v1003, %v1003
  %v1228 = vmul.f32 %v1004, %v1004
  %v1229 = vmul.f32 %v1005, %v1005
  %v1230 = vmul.f32 %v1006, %v1006
  %v1231 = vadd.f32 %v1007, 0.0
  %v1232 = vadd.f32 %v1008, 0.0
  %v1233 = vadd.f32 %v1009, 0.0
  %v1234 = vadd.f32 %v1010, 0.0
  %v1235 = vadd.f32 %v1011, 0.0
  %v1236 = vadd.f32 %v1012, 0.0
  %v1237 = vadd.f32 %v1013, 0.0
  %v1238 = vadd.f32 %v1014, 0.0
  %v1239 = vadd.f32 %v1015, 0.0
  %v1240 = vadd.f32 %v1016, 0.0
  %v1241 = vadd.f32 %v1017, 0.0
  %v1242 = vadd.f32 %v1018, 0.0
  %v1243 = vadd.f32 %v1019, 0.0
  %v1244 = vadd.f32 %v1020, 0.0
  %v1245 = vadd.f32 %v1021, 0.0
  %v1246 = vadd.f32 %v1022, 0.0
  %v1247 = vadd.f32 %v1023, 0.0
  %v1248 = vadd.f32 %v1024, 0.0
  %v1249 = vadd.f32 %v1025, 0.0
  %v1250 = vadd.f32 %v1026, 0.0
  %v1251 = vadd.f32 %v1027, 0.0
  %v1252 = vadd.f32 %v1028, 0.0
  %v1253 = vadd.f32 %v1029, 0.0
  %v1254 = vadd.f32 %v1030, 0.0
  %v1255 = vadd.f32 %v1031, 0.0
  %v1256 = vadd.f32 %v1032, 0.0
  %v1257 = vadd.f32 %v1033, 0.0
  %v1258 = vadd.f32 %v1034, 0.0
  %v1259 = vadd.f32 %v1035, 0.0
  %v1260 = vadd.f32 %v1036, 0.0
  %v1261 = vadd.f32 %v1037, 0.0
  %v1262 = vadd.f32 %v1038, 0.0
  %v1263 = vadd.f32 %v1039, 0.0
  %v1264 = vadd.f32 %v1040, 0.0
  %v1265 = vadd.f32 %v1041, 0.0
  %v1266 = vadd.f32 %v1042, 0.0
  %v1267 = vadd.f32 %v1043, 0.0
  %v1268 = vadd.f32 %v1044, 0.0
  %v1269 = vadd.f32 %v1045, 0.0
  %v1270 = vadd.f32 %v1046, 0.0
  %v1271 = vadd.f32 %v1047, 0.0
  %v1272 = vadd.f32 %v1048, 0.0
  %v1273 = vadd.f32 %v1049, 0.0
  %v1274 = vadd.f32 %v1050, 0.0
  %v1275 = vadd.f32 %v1051, 0.0
  %v1276 = vadd.f32 %v1052, 0.0
  %v1277 = vadd.f32 %v1053, 0.0
  %v1278 = vadd.f32 %v1054, 0.0
  %v1279 = vadd.f32 %v1055, 0.0
  %v1280 = vadd.f32 %v1056, 0.0
  %v1281 = vadd.f32 %v1057, 0.0
  %v1282 = vadd.f32 %v1058, 0.0
  %v1283 = vadd.f32 %v1059, 0.0
  %v1284 = vadd.f32 %v1060, 0.0
  %v1285 = vadd.f32 %v1061, 0.0
  %v1286 = vadd.f32 %v1062, 0.0
  %v1287 = vadd.f32 %v1063, 0.0
  %v1288 = vadd.f32 %v1064, 0.0
  %v1289 = vadd.f32 %v1065, 0.0
  %v1290 = vadd.f32 %v1066, 0.0
  %v1291 = vadd.f32 %v1067, 0.0
  %v1292 = vadd.f32 %v1068, 0.0
  %v1293 = vadd.f32 %v1069, 0.0
  %v1294 = vadd.f32 %v1070, 0.0
  %v1295 = vadd.f32 %v1071, 0.0
  %v1296 = vadd.f32 %v1072, 0.0
  %v1297 = vadd.f32 %v1073, 0.0
  %v1298 = vadd.f32 %v1074, 0.0
  %v1299 = vadd.f32 %v1075, 0.0
  %v1300 = vadd.f32 %v1076, 0.0
  %v1301 = vadd.f32 %v1077, 0.0
  %v1302 = vadd.f32 %v1078, 0.0
  %v1303 = vadd.f32 %v1079, 0.0
  %v1304 = vadd.f32 %v1080, 0.0
  %v1305 = vadd.f32 %v1081, 0.0
  %v1306 = vadd.f32 %v1082, 0.0
  %v1307 = vadd.f32 %v1083, 0.0
  %v1308 = vadd.f32 %v1084, 0.0
  %v1309 = vadd.f32 %v1085, 0.0
  %v1310 = vadd.f32 %v1086, 0.0
  %v1311 = vadd.f32 %v1087, 0.0
  %v1312 = vadd.f32 %v1088, 0.0
  %v1313 = vadd.f32 %v1089, 0.0
  %v1314 = vadd.f32 %v1090, 0.0
  %v1315 = vadd.f32 %v1091, 0.0
  %v1316 = vadd.f32 %v1092, 0.0
  %v1317 = vadd.f32 %v1093, 0.0
  %v1318 = vadd.f32 %v1094, 0.0
  %v1319 = vadd.f32 %v1095, 0.0
  %v1320 = vadd.f32 %v1096, 0.0
  %v1321 = vadd.f32 %v1097, 0.0
  %v1322 = vadd.f32 %v1098, 0.0
  %v1323 = vadd.f32 %v1099, 0.0
  %v1324 = vadd.f32 %v1100, 0.0
  %v1325 = vadd.f32 %v1101, 0.0
  %v1326 = vadd.f32 %v1102, 0.0
  %v1327 = vadd.f32 %v1103, 0.0
  %v1328 = vadd.f32 %v1104, 0.0
  %v1329 = vadd.f32 %v1105, 0.0
  %v1330 = vadd.f32 %v1106, 0.0
  %v1331 = vadd.f32 %v1107, 0.0
  %v1332 = vadd.f32 %v1108, 0.0
  %v1333 = vadd.f32 %v1109, 0.0
  %v1334 = vadd.f32 %v1110, 0.0
  %v1335 = vadd.f32 %v1111, 0.0
  %v1336 = vadd.f32 %v1112, 0.0
  %v1337 = vadd.f32 %v1113, 0.0
  %v1338 = vadd.f32 %v1114, 0.0
  %v1339 = vadd.f32 %v1115, 0.0
  %v1340 = vadd.f32 %v1116, 0.0
  %v1341 = vadd.f32 %v1117, 0.0
  %v1342 = vadd.f32 %v1118, 0.0
  %v1343 = vadd.f32 %v1119, 0.0
  %v1344 = vadd.f32 %v1120, 0.0
  %v1345 = vadd.f32 %v1121, 0.0
  %v1346 = vadd.f32 %v1122, 0.0
  %v1347 = vadd.f32 %v1123, 0.0
  %v1348 = vadd.f32 %v1124, 0.0
  %v1349 = vadd.f32 %v1125, 0.0
  %v1350 = vadd.f32 %v1126, 0.0
  %v1351 = vadd.f32 %v1127, 0.0
  %v1352 = vadd.f32 %v1128, 0.0
  %v1353 = vadd.f32 %v1129, 0.0
  %v1354 = vadd.f32 %v1130, 0.0
  %v1355 = vadd.f32 %v1131, 0.0
  %v1356 = vadd.f32 %v1132, 0.0
  %v1357 = vadd.f32 %v1133, 0.0
  %v1358 = vadd.f32 %v1134, 0.0
  %v1359 = vadd.f32 %v1135, 0.0
  %v1360 = vadd.f32 %v1136, 0.0
  %v1361 = vadd.f32 %v1137, 0.0
  %v1362 = vadd.f32 %v1138, 0.0
  %v1363 = vadd.f32 %v1139, 0.0
  %v1364 = vadd.f32 %v1140, 0.0
  %v1365 = vadd.f32 %v1141, 0.0
  %v1366 = vadd.f32 %v1142, 0.0
  %v1367 = vadd.f32 %v1143, 0.0
  %v1368 = vadd.f32 %v1144, 0.0
  %v1369 = vadd.f32 %v1145, 0.0
  %v1370 = vadd.f32 %v1146, 0.0
  %v1371 = vadd.f32 %v1147, 0.0
  %v1372 = vadd.f32 %v1148, 0.0
  %v1373 = vadd.f32 %v1149, 0.0
  %v1374 = vadd.f32 %v1150, 0.0
  %v1375 = vadd.f32 %v1151, 0.0
  %v1376 = vadd.f32 %v1152, 0.0
  %v1377 = vadd.f32 %v1153, 0.0
  %v1378 = vadd.f32 %v1154, 0.0
  %v1379 = vadd.f32 %v1155, 0.0
  %v1380 = vadd.f32 %v1156, 0.0
  %v1381 = vadd.f32 %v1157, 0.0
  %v1382 = vadd.f32 %v1158, 0.0
  %v1383 = vadd.f32 %v1159, 0.0
  %v1384 = vadd.f32 %v1160, 0.0
  %v1385 = vadd.f32 %v1161, 0.0
  %v1386 = vadd.f32 %v1162, 0.0
  %v1387 = vadd.f32 %v1163, 0.0
  %v1388 = vadd.f32 %v1164, 0.0
  %v1389 = vadd.f32 %v1165, 0.0
  %v1390 = vadd.f32 %v1166, 0.0
  %v1391 = vadd.f32 %v1167, 0.0
  %v1392 = vadd.f32 %v1168, 0.0
  %v1393 = vadd.f32 %v1169, 0.0
  %v1394 = vadd.f32 %v1170, 0.0
  %v1395 = vadd.f32 %v1171, 0.0
  %v1396 = vadd.f32 %v1172, 0.0
  %v1397 = vadd.f32 %v1173, 0.0
  %v1398 = vadd.f32 %v1174, 0.0
  %v1399 = vadd.f32 %v1175, 0.0
  %v1400 = vadd.f32 %v1176, 0.0
  %v1401 = vadd.f32 %v1177, 0.0
  %v1402 = vadd.f32 %v1178, 0.0
  %v1403 = vadd.f32 %v1179, 0.0
  %v1404 = vadd.f32 %v1180, 0.0
  %v1405 = vadd.f32 %v1181, 0.0
  %v1406 = vadd.f32 %v1182, 0.0
  %v1407 = vadd.f32 %v1183, 0.0
  %v1408 = vadd.f32 %v1184, 0.0
  %v1409 = vadd.f32 %v1185, 0.0
  %v1410 = vadd.f32 %v1186, 0.0
  %v1411 = vadd.f32 %v1187, 0.0
  %v1412 = vadd.f32 %v1188, 0.0
  %v1413 = vadd.f32 %v1189, 0.0
  %v1414 = vadd.f32 %v1190, 0.0
  %v1415 = vadd.f32 %v1191, 0.0
  %v1416 = vadd.f32 %v1192, 0.0
  %v1417 = vadd.f32 %v1193, 0.0
  %v1418 = vadd.f32 %v1194, 0.0
  %v1419 = vadd.f32 %v1195, 0.0
  %v1420 = vadd.f32 %v1196, 0.0
  %v1421 = vadd.f32 %v1197, 0.0
  %v1422 = vadd.f32 %v1198, 0.0
  %v1423 = vadd.f32 %v1199, 0.0
  %v1424 = vadd.f32 %v1200, 0.0
  %v1425 = vadd.f32 %v1201, 0.0
  %v1426 = vadd.f32 %v1202, 0.0
  %v1427 = vadd.f32 %v1203, 0.0
  %v1428 = vadd.f32 %v1204, 0.0
  %v1429 = vadd.f32 %v1205, 0.0
  %v1430 = vadd.f32 %v1206, 0.0
  %v1431 = vadd.f32 %v1207, 0.0
  %v1432 = vadd.f32 %v1208, 0.0
  %v1433 = vadd.f32 %v1209, 0.0
  %v1434 = vadd.f32 %v1210, 0.0
  %v1435 = vadd.f32 %v1211, 0.0
  %v1436 = vadd.f32 %v1212, 0.0
  %v1437 = vadd.f32 %v1213, 0.0
  %v1438 = vadd.f32 %v1214, 0.0
  %v1439 = vadd.f32 %v1215, 0.0
  %v1440 = vadd.f32 %v1216, 0.0
  %v1441 = vadd.f32 %v1217, 0.0
  %v1442 = vadd.f32 %v1218, 0.0
  %v1443 = vadd.f32 %v1219, 0.0
  %v1444 = vadd.f32 %v1220, 0.0
  %v1445 = vadd.f32 %v1221, 0.0
  %v1446 = vadd.f32 %v1222, 0.0
  %v1447 = vadd.f32 %v1223, 0.0
  %v1448 = vadd.f32 %v1224, 0.0
  %v1449 = vadd.f32 %v1225, 0.0
  %v1450 = vadd.f32 %v1226, 0.0
  %v1451 = vadd.f32 %v1227, 0.0
  %v1452 = vadd.f32 %v1228, 0.0
  %v1453 = vadd.f32 %v1229, 0.0
  %v1454 = vadd.f32 %v1230, 0.0
  %v1455 = vadd.f32 %v1231, %v1232
  %v1456 = vadd.f32 %v1455, %v1233
  %v1457 = vadd.f32 %v1456, %v1234
  %v1458 = vadd.f32 %v1457, %v1235
  %v1459 = vadd.f32 %v1458, %v1236
  %v1460 = vsel %vm467, %v1237, 0.0
  %v1461 = vadd.f32 %v1459, %v1460
  %1462 = vadd.xlane.f32.xlu0 %v1461
  %v1463 = vpop.xlane.xlu0 %1462
  %v1464 = vadd.f32 %v1238, %v1239
  %v1465 = vadd.f32 %v1464, %v1240
  %v1466 = vadd.f32 %v1465, %v1241
  %v1467 = vadd.f32 %v1466, %v1242
  %v1468 = vadd.f32 %v1467, %v1243
  %v1469 = vsel %vm467, %v1244, 0.0
  %v1470 = vadd.f32 %v1468, %v1469
  %1471 = vadd.xlane.f32.xlu0 %v1470
  %v1472 = vpop.xlane.xlu0 %1471
  %v1473 = vadd.f32 %v1245, %v1246
  %v1474 = vadd.f32 %v1473, %v1247
  %v1475 = vadd.f32 %v1474, %v1248
  %v1476 = vadd.f32 %v1475, %v1249
  %v1477 = vadd.f32 %v1476, %v1250
  %v1478 = vsel %vm467, %v1251, 0.0
  %v1479 = vadd.f32 %v1477, %v1478
  %1480 = vadd.xlane.f32.xlu0 %v1479
  %v1481 = vpop.xlane.xlu0 %1480
  %v1482 = vadd.f32 %v1252, %v1253
  %v1483 = vadd.f32 %v1482, %v1254
  %v1484 = vadd.f32 %v1483, %v1255
  %v1485 = vadd.f32 %v1484, %v1256
  %v1486 = vadd.f32 %v1485, %v1257
  %v1487 = vsel %vm467, %v1258, 0.0
  %v1488 = vadd.f32 %v1486, %v1487
  %1489 = vadd.xlane.f32.xlu0 %v1488
  %v1490 = vpop.xlane.xlu0 %1489
  %v1491 = vadd.f32 %v1259, %v1260
  %v1492 = vadd.f32 %v1491, %v1261
  %v1493 = vadd.f32 %v1492, %v1262
  %v1494 = vadd.f32 %v1493, %v1263
  %v1495 = vadd.f32 %v1494, %v1264
  %v1496 = vsel %vm467, %v1265, 0.0
  %v1497 = vadd.f32 %v1495, %v1496
  %1498 = vadd.xlane.f32.xlu0 %v1497
  %v1499 = vpop.xlane.xlu0 %1498
  %v1500 = vadd.f32 %v1266, %v1267
  %v1501 = vadd.f32 %v1500, %v1268
  %v1502 = vadd.f32 %v1501, %v1269
  %v1503 = vadd.f32 %v1502, %v1270
  %v1504 = vadd.f32 %v1503, %v1271
  %v1505 = vsel %vm467, %v1272, 0.0
  %v1506 = vadd.f32 %v1504, %v1505
  %1507 = vadd.xlane.f32.xlu0 %v1506
  %v1508 = vpop.xlane.xlu0 %1507
  %v1509 = vadd.f32 %v1273, %v1274
  %v1510 = vadd.f32 %v1509, %v1275
  %v1511 = vadd.f32 %v1510, %v1276
  %v1512 = vadd.f32 %v1511, %v1277
  %v1513 = vadd.f32 %v1512, %v1278
  %v1514 = vsel %vm467, %v1279, 0.0
  %v1515 = vadd.f32 %v1513, %v1514
  %1516 = vadd.xlane.f32.xlu0 %v1515
  %v1517 = vpop.xlane.xlu0 %1516
  %v1518 = vadd.f32 %v1280, %v1281
  %v1519 = vadd.f32 %v1518, %v1282
  %v1520 = vadd.f32 %v1519, %v1283
  %v1521 = vadd.f32 %v1520, %v1284
  %v1522 = vadd.f32 %v1521, %v1285
  %v1523 = vsel %vm467, %v1286, 0.0
  %v1524 = vadd.f32 %v1522, %v1523
  %1525 = vadd.xlane.f32.xlu0 %v1524
  %v1526 = vpop.xlane.xlu0 %1525
  %v1527 = vadd.f32 %v1287, %v1288
  %v1528 = vadd.f32 %v1527, %v1289
  %v1529 = vadd.f32 %v1528, %v1290
  %v1530 = vadd.f32 %v1529, %v1291
  %v1531 = vadd.f32 %v1530, %v1292
  %v1532 = vsel %vm467, %v1293, 0.0
  %v1533 = vadd.f32 %v1531, %v1532
  %1534 = vadd.xlane.f32.xlu0 %v1533
  %v1535 = vpop.xlane.xlu0 %1534
  %v1536 = vadd.f32 %v1294, %v1295
  %v1537 = vadd.f32 %v1536, %v1296
  %v1538 = vadd.f32 %v1537, %v1297
  %v1539 = vadd.f32 %v1538, %v1298
  %v1540 = vadd.f32 %v1539, %v1299
  %v1541 = vsel %vm467, %v1300, 0.0
  %v1542 = vadd.f32 %v1540, %v1541
  %1543 = vadd.xlane.f32.xlu0 %v1542
  %v1544 = vpop.xlane.xlu0 %1543
  %v1545 = vadd.f32 %v1301, %v1302
  %v1546 = vadd.f32 %v1545, %v1303
  %v1547 = vadd.f32 %v1546, %v1304
  %v1548 = vadd.f32 %v1547, %v1305
  %v1549 = vadd.f32 %v1548, %v1306
  %v1550 = vsel %vm467, %v1307, 0.0
  %v1551 = vadd.f32 %v1549, %v1550
  %1552 = vadd.xlane.f32.xlu0 %v1551
  %v1553 = vpop.xlane.xlu0 %1552
  %v1554 = vadd.f32 %v1308, %v1309
  %v1555 = vadd.f32 %v1554, %v1310
  %v1556 = vadd.f32 %v1555, %v1311
  %v1557 = vadd.f32 %v1556, %v1312
  %v1558 = vadd.f32 %v1557, %v1313
  %v1559 = vsel %vm467, %v1314, 0.0
  %v1560 = vadd.f32 %v1558, %v1559
  %1561 = vadd.xlane.f32.xlu0 %v1560
  %v1562 = vpop.xlane.xlu0 %1561
  %v1563 = vadd.f32 %v1315, %v1316
  %v1564 = vadd.f32 %v1563, %v1317
  %v1565 = vadd.f32 %v1564, %v1318
  %v1566 = vadd.f32 %v1565, %v1319
  %v1567 = vadd.f32 %v1566, %v1320
  %v1568 = vsel %vm467, %v1321, 0.0
  %v1569 = vadd.f32 %v1567, %v1568
  %1570 = vadd.xlane.f32.xlu0 %v1569
  %v1571 = vpop.xlane.xlu0 %1570
  %v1572 = vadd.f32 %v1322, %v1323
  %v1573 = vadd.f32 %v1572, %v1324
  %v1574 = vadd.f32 %v1573, %v1325
  %v1575 = vadd.f32 %v1574, %v1326
  %v1576 = vadd.f32 %v1575, %v1327
  %v1577 = vsel %vm467, %v1328, 0.0
  %v1578 = vadd.f32 %v1576, %v1577
  %1579 = vadd.xlane.f32.xlu0 %v1578
  %v1580 = vpop.xlane.xlu0 %1579
  %v1581 = vadd.f32 %v1329, %v1330
  %v1582 = vadd.f32 %v1581, %v1331
  %v1583 = vadd.f32 %v1582, %v1332
  %v1584 = vadd.f32 %v1583, %v1333
  %v1585 = vadd.f32 %v1584, %v1334
  %v1586 = vsel %vm467, %v1335, 0.0
  %v1587 = vadd.f32 %v1585, %v1586
  %1588 = vadd.xlane.f32.xlu0 %v1587
  %v1589 = vpop.xlane.xlu0 %1588
  %v1590 = vadd.f32 %v1336, %v1337
  %v1591 = vadd.f32 %v1590, %v1338
  %v1592 = vadd.f32 %v1591, %v1339
  %v1593 = vadd.f32 %v1592, %v1340
  %v1594 = vadd.f32 %v1593, %v1341
  %v1595 = vsel %vm467, %v1342, 0.0
  %v1596 = vadd.f32 %v1594, %v1595
  %1597 = vadd.xlane.f32.xlu0 %v1596
  %v1598 = vpop.xlane.xlu0 %1597
  %v1599 = vadd.f32 %v1343, %v1344
  %v1600 = vadd.f32 %v1599, %v1345
  %v1601 = vadd.f32 %v1600, %v1346
  %v1602 = vadd.f32 %v1601, %v1347
  %v1603 = vadd.f32 %v1602, %v1348
  %v1604 = vsel %vm467, %v1349, 0.0
  %v1605 = vadd.f32 %v1603, %v1604
  %1606 = vadd.xlane.f32.xlu0 %v1605
  %v1607 = vpop.xlane.xlu0 %1606
  %v1608 = vadd.f32 %v1350, %v1351
  %v1609 = vadd.f32 %v1608, %v1352
  %v1610 = vadd.f32 %v1609, %v1353
  %v1611 = vadd.f32 %v1610, %v1354
  %v1612 = vadd.f32 %v1611, %v1355
  %v1613 = vsel %vm467, %v1356, 0.0
  %v1614 = vadd.f32 %v1612, %v1613
  %1615 = vadd.xlane.f32.xlu0 %v1614
  %v1616 = vpop.xlane.xlu0 %1615
  %v1617 = vadd.f32 %v1357, %v1358
  %v1618 = vadd.f32 %v1617, %v1359
  %v1619 = vadd.f32 %v1618, %v1360
  %v1620 = vadd.f32 %v1619, %v1361
  %v1621 = vadd.f32 %v1620, %v1362
  %v1622 = vsel %vm467, %v1363, 0.0
  %v1623 = vadd.f32 %v1621, %v1622
  %1624 = vadd.xlane.f32.xlu0 %v1623
  %v1625 = vpop.xlane.xlu0 %1624
  %v1626 = vadd.f32 %v1364, %v1365
  %v1627 = vadd.f32 %v1626, %v1366
  %v1628 = vadd.f32 %v1627, %v1367
  %v1629 = vadd.f32 %v1628, %v1368
  %v1630 = vadd.f32 %v1629, %v1369
  %v1631 = vsel %vm467, %v1370, 0.0
  %v1632 = vadd.f32 %v1630, %v1631
  %1633 = vadd.xlane.f32.xlu0 %v1632
  %v1634 = vpop.xlane.xlu0 %1633
  %v1635 = vadd.f32 %v1371, %v1372
  %v1636 = vadd.f32 %v1635, %v1373
  %v1637 = vadd.f32 %v1636, %v1374
  %v1638 = vadd.f32 %v1637, %v1375
  %v1639 = vadd.f32 %v1638, %v1376
  %v1640 = vsel %vm467, %v1377, 0.0
  %v1641 = vadd.f32 %v1639, %v1640
  %1642 = vadd.xlane.f32.xlu0 %v1641
  %v1643 = vpop.xlane.xlu0 %1642
  %v1644 = vadd.f32 %v1378, %v1379
  %v1645 = vadd.f32 %v1644, %v1380
  %v1646 = vadd.f32 %v1645, %v1381
  %v1647 = vadd.f32 %v1646, %v1382
  %v1648 = vadd.f32 %v1647, %v1383
  %v1649 = vsel %vm467, %v1384, 0.0
  %v1650 = vadd.f32 %v1648, %v1649
  %1651 = vadd.xlane.f32.xlu0 %v1650
  %v1652 = vpop.xlane.xlu0 %1651
  %v1653 = vadd.f32 %v1385, %v1386
  %v1654 = vadd.f32 %v1653, %v1387
  %v1655 = vadd.f32 %v1654, %v1388
  %v1656 = vadd.f32 %v1655, %v1389
  %v1657 = vadd.f32 %v1656, %v1390
  %v1658 = vsel %vm467, %v1391, 0.0
  %v1659 = vadd.f32 %v1657, %v1658
  %1660 = vadd.xlane.f32.xlu0 %v1659
  %v1661 = vpop.xlane.xlu0 %1660
  %v1662 = vadd.f32 %v1392, %v1393
  %v1663 = vadd.f32 %v1662, %v1394
  %v1664 = vadd.f32 %v1663, %v1395
  %v1665 = vadd.f32 %v1664, %v1396
  %v1666 = vadd.f32 %v1665, %v1397
  %v1667 = vsel %vm467, %v1398, 0.0
  %v1668 = vadd.f32 %v1666, %v1667
  %1669 = vadd.xlane.f32.xlu0 %v1668
  %v1670 = vpop.xlane.xlu0 %1669
  %v1671 = vadd.f32 %v1399, %v1400
  %v1672 = vadd.f32 %v1671, %v1401
  %v1673 = vadd.f32 %v1672, %v1402
  %v1674 = vadd.f32 %v1673, %v1403
  %v1675 = vadd.f32 %v1674, %v1404
  %v1676 = vsel %vm467, %v1405, 0.0
  %v1677 = vadd.f32 %v1675, %v1676
  %1678 = vadd.xlane.f32.xlu0 %v1677
  %v1679 = vpop.xlane.xlu0 %1678
  %v1680 = vadd.f32 %v1406, %v1407
  %v1681 = vadd.f32 %v1680, %v1408
  %v1682 = vadd.f32 %v1681, %v1409
  %v1683 = vadd.f32 %v1682, %v1410
  %v1684 = vadd.f32 %v1683, %v1411
  %v1685 = vsel %vm467, %v1412, 0.0
  %v1686 = vadd.f32 %v1684, %v1685
  %1687 = vadd.xlane.f32.xlu0 %v1686
  %v1688 = vpop.xlane.xlu0 %1687
  %v1689 = vadd.f32 %v1413, %v1414
  %v1690 = vadd.f32 %v1689, %v1415
  %v1691 = vadd.f32 %v1690, %v1416
  %v1692 = vadd.f32 %v1691, %v1417
  %v1693 = vadd.f32 %v1692, %v1418
  %v1694 = vsel %vm467, %v1419, 0.0
  %v1695 = vadd.f32 %v1693, %v1694
  %1696 = vadd.xlane.f32.xlu0 %v1695
  %v1697 = vpop.xlane.xlu0 %1696
  %v1698 = vadd.f32 %v1420, %v1421
  %v1699 = vadd.f32 %v1698, %v1422
  %v1700 = vadd.f32 %v1699, %v1423
  %v1701 = vadd.f32 %v1700, %v1424
  %v1702 = vadd.f32 %v1701, %v1425
  %v1703 = vsel %vm467, %v1426, 0.0
  %v1704 = vadd.f32 %v1702, %v1703
  %1705 = vadd.xlane.f32.xlu0 %v1704
  %v1706 = vpop.xlane.xlu0 %1705
  %v1707 = vadd.f32 %v1427, %v1428
  %v1708 = vadd.f32 %v1707, %v1429
  %v1709 = vadd.f32 %v1708, %v1430
  %v1710 = vadd.f32 %v1709, %v1431
  %v1711 = vadd.f32 %v1710, %v1432
  %v1712 = vsel %vm467, %v1433, 0.0
  %v1713 = vadd.f32 %v1711, %v1712
  %1714 = vadd.xlane.f32.xlu0 %v1713
  %v1715 = vpop.xlane.xlu0 %1714
  %v1716 = vadd.f32 %v1434, %v1435
  %v1717 = vadd.f32 %v1716, %v1436
  %v1718 = vadd.f32 %v1717, %v1437
  %v1719 = vadd.f32 %v1718, %v1438
  %v1720 = vadd.f32 %v1719, %v1439
  %v1721 = vsel %vm467, %v1440, 0.0
  %v1722 = vadd.f32 %v1720, %v1721
  %1723 = vadd.xlane.f32.xlu0 %v1722
  %v1724 = vpop.xlane.xlu0 %1723
  %v1725 = vadd.f32 %v1441, %v1442
  %v1726 = vadd.f32 %v1725, %v1443
  %v1727 = vadd.f32 %v1726, %v1444
  %v1728 = vadd.f32 %v1727, %v1445
  %v1729 = vadd.f32 %v1728, %v1446
  %v1730 = vsel %vm467, %v1447, 0.0
  %v1731 = vadd.f32 %v1729, %v1730
  %1732 = vadd.xlane.f32.xlu0 %v1731
  %v1733 = vpop.xlane.xlu0 %1732
  %v1734 = vadd.f32 %v1448, %v1449
  %v1735 = vadd.f32 %v1734, %v1450
  %v1736 = vadd.f32 %v1735, %v1451
  %v1737 = vadd.f32 %v1736, %v1452
  %v1738 = vadd.f32 %v1737, %v1453
  %v1739 = vsel %vm467, %v1454, 0.0
  %v1740 = vadd.f32 %v1738, %v1739
  %1741 = vadd.xlane.f32.xlu0 %v1740
  %v1742 = vpop.xlane.xlu0 %1741
  %v1743 = vmul.f32 %v1463, 0.0012755102
  %v1744 = vmul.f32 %v1472, 0.0012755102
  %v1745 = vmul.f32 %v1481, 0.0012755102
  %v1746 = vmul.f32 %v1490, 0.0012755102
  %v1747 = vmul.f32 %v1499, 0.0012755102
  %v1748 = vmul.f32 %v1508, 0.0012755102
  %v1749 = vmul.f32 %v1517, 0.0012755102
  %v1750 = vmul.f32 %v1526, 0.0012755102
  %v1751 = vmul.f32 %v1535, 0.0012755102
  %v1752 = vmul.f32 %v1544, 0.0012755102
  %v1753 = vmul.f32 %v1553, 0.0012755102
  %v1754 = vmul.f32 %v1562, 0.0012755102
  %v1755 = vmul.f32 %v1571, 0.0012755102
  %v1756 = vmul.f32 %v1580, 0.0012755102
  %v1757 = vmul.f32 %v1589, 0.0012755102
  %v1758 = vmul.f32 %v1598, 0.0012755102
  %v1759 = vmul.f32 %v1607, 0.0012755102
  %v1760 = vmul.f32 %v1616, 0.0012755102
  %v1761 = vmul.f32 %v1625, 0.0012755102
  %v1762 = vmul.f32 %v1634, 0.0012755102
  %v1763 = vmul.f32 %v1643, 0.0012755102
  %v1764 = vmul.f32 %v1652, 0.0012755102
  %v1765 = vmul.f32 %v1661, 0.0012755102
  %v1766 = vmul.f32 %v1670, 0.0012755102
  %v1767 = vmul.f32 %v1679, 0.0012755102
  %v1768 = vmul.f32 %v1688, 0.0012755102
  %v1769 = vmul.f32 %v1697, 0.0012755102
  %v1770 = vmul.f32 %v1706, 0.0012755102
  %v1771 = vmul.f32 %v1715, 0.0012755102
  %v1772 = vmul.f32 %v1724, 0.0012755102
  %v1773 = vmul.f32 %v1733, 0.0012755102
  %v1774 = vmul.f32 %v1742, 0.0012755102
  %v1775 = vadd.f32 %v1743, 1e-05
  %v1776 = vadd.f32 %v1744, 1e-05
  %v1777 = vadd.f32 %v1745, 1e-05
  %v1778 = vadd.f32 %v1746, 1e-05
  %v1779 = vadd.f32 %v1747, 1e-05
  %v1780 = vadd.f32 %v1748, 1e-05
  %v1781 = vadd.f32 %v1749, 1e-05
  %v1782 = vadd.f32 %v1750, 1e-05
  %v1783 = vadd.f32 %v1751, 1e-05
  %v1784 = vadd.f32 %v1752, 1e-05
  %v1785 = vadd.f32 %v1753, 1e-05
  %v1786 = vadd.f32 %v1754, 1e-05
  %v1787 = vadd.f32 %v1755, 1e-05
  %v1788 = vadd.f32 %v1756, 1e-05
  %v1789 = vadd.f32 %v1757, 1e-05
  %v1790 = vadd.f32 %v1758, 1e-05
  %v1791 = vadd.f32 %v1759, 1e-05
  %v1792 = vadd.f32 %v1760, 1e-05
  %v1793 = vadd.f32 %v1761, 1e-05
  %v1794 = vadd.f32 %v1762, 1e-05
  %v1795 = vadd.f32 %v1763, 1e-05
  %v1796 = vadd.f32 %v1764, 1e-05
  %v1797 = vadd.f32 %v1765, 1e-05
  %v1798 = vadd.f32 %v1766, 1e-05
  %v1799 = vadd.f32 %v1767, 1e-05
  %v1800 = vadd.f32 %v1768, 1e-05
  %v1801 = vadd.f32 %v1769, 1e-05
  %v1802 = vadd.f32 %v1770, 1e-05
  %v1803 = vadd.f32 %v1771, 1e-05
  %v1804 = vadd.f32 %v1772, 1e-05
  %v1805 = vadd.f32 %v1773, 1e-05
  %v1806 = vadd.f32 %v1774, 1e-05
  %v1807 = vrsqrt.pop %v1775
  %v1808 = vrsqrt.pop %v1776
  %v1809 = vrsqrt.pop %v1777
  %v1810 = vrsqrt.pop %v1778
  %v1811 = vrsqrt.pop %v1779
  %v1812 = vrsqrt.pop %v1780
  %v1813 = vrsqrt.pop %v1781
  %v1814 = vrsqrt.pop %v1782
  %v1815 = vrsqrt.pop %v1783
  %v1816 = vrsqrt.pop %v1784
  %v1817 = vrsqrt.pop %v1785
  %v1818 = vrsqrt.pop %v1786
  %v1819 = vrsqrt.pop %v1787
  %v1820 = vrsqrt.pop %v1788
  %v1821 = vrsqrt.pop %v1789
  %v1822 = vrsqrt.pop %v1790
  %v1823 = vrsqrt.pop %v1791
  %v1824 = vrsqrt.pop %v1792
  %v1825 = vrsqrt.pop %v1793
  %v1826 = vrsqrt.pop %v1794
  %v1827 = vrsqrt.pop %v1795
  %v1828 = vrsqrt.pop %v1796
  %v1829 = vrsqrt.pop %v1797
  %v1830 = vrsqrt.pop %v1798
  %v1831 = vrsqrt.pop %v1799
  %v1832 = vrsqrt.pop %v1800
  %v1833 = vrsqrt.pop %v1801
  %v1834 = vrsqrt.pop %v1802
  %v1835 = vrsqrt.pop %v1803
  %v1836 = vrsqrt.pop %v1804
  %v1837 = vrsqrt.pop %v1805
  %v1838 = vrsqrt.pop %v1806
  %v1839 = vld [vmem:[%s1] sm:$0xff]
  %v1840 = vld [vmem:[%s1 + $0x8] sm:$0xff]
  %v1841 = vld [vmem:[%s1 + $0x10] sm:$0xff]
  %v1842 = vld [vmem:[%s1 + $0x18] sm:$0xff]
  %v1843 = vld [vmem:[%s1 + $0x20] sm:$0xff]
  %v1844 = vld [vmem:[%s1 + $0x28] sm:$0xff]
  %v1845 = vld [vmem:[%s1 + $0x30] sm:$0xff]
  %v1846 = vld [vmem:[%s1 + $0x38] sm:$0xff]
  %v1847 = vld [vmem:[%s1 + $0x40] sm:$0xff]
  %v1848 = vld [vmem:[%s1 + $0x48] sm:$0xff]
  %v1849 = vld [vmem:[%s1 + $0x50] sm:$0xff]
  %v1850 = vld [vmem:[%s1 + $0x58] sm:$0xff]
  %v1851 = vld [vmem:[%s1 + $0x60] sm:$0xff]
  %v1852 = vld [vmem:[%s1 + $0x68] sm:$0xff]
  %v1853 = vld [vmem:[%s1 + $0x70] sm:$0xff]
  %v1854 = vld [vmem:[%s1 + $0x78] sm:$0xff]
  %v1855 = vld [vmem:[%s1 + $0x80] sm:$0xff]
  %v1856 = vld [vmem:[%s1 + $0x88] sm:$0xff]
  %v1857 = vld [vmem:[%s1 + $0x90] sm:$0xff]
  %v1858 = vld [vmem:[%s1 + $0x98] sm:$0xff]
  %v1859 = vld [vmem:[%s1 + $0xa0] sm:$0xff]
  %v1860 = vld [vmem:[%s1 + $0xa8] sm:$0xff]
  %v1861 = vld [vmem:[%s1 + $0xb0] sm:$0xff]
  %v1862 = vld [vmem:[%s1 + $0xb8] sm:$0xff]
  %v1863 = vld [vmem:[%s1 + $0xc0] sm:$0xff]
  %v1864 = vld [vmem:[%s1 + $0xc8] sm:$0xff]
  %v1865 = vld [vmem:[%s1 + $0xd0] sm:$0xff]
  %v1866 = vld [vmem:[%s1 + $0xd8] sm:$0xff]
  %v1867 = vld [vmem:[%s1 + $0xe0] sm:$0xff]
  %v1868 = vld [vmem:[%s1 + $0xe8] sm:$0xff]
  %v1869 = vld [vmem:[%s1 + $0xf0] sm:$0xff]
  %v1870 = vld [vmem:[%s1 + $0xf8] sm:$0xff]
  %v1871 = vmul.f32 %v1839, %v1807
  %v1872 = vmul.f32 %v1840, %v1808
  %v1873 = vmul.f32 %v1841, %v1809
  %v1874 = vmul.f32 %v1842, %v1810
  %v1875 = vmul.f32 %v1843, %v1811
  %v1876 = vmul.f32 %v1844, %v1812
  %v1877 = vmul.f32 %v1845, %v1813
  %v1878 = vmul.f32 %v1846, %v1814
  %v1879 = vmul.f32 %v1847, %v1815
  %v1880 = vmul.f32 %v1848, %v1816
  %v1881 = vmul.f32 %v1849, %v1817
  %v1882 = vmul.f32 %v1850, %v1818
  %v1883 = vmul.f32 %v1851, %v1819
  %v1884 = vmul.f32 %v1852, %v1820
  %v1885 = vmul.f32 %v1853, %v1821
  %v1886 = vmul.f32 %v1854, %v1822
  %v1887 = vmul.f32 %v1855, %v1823
  %v1888 = vmul.f32 %v1856, %v1824
  %v1889 = vmul.f32 %v1857, %v1825
  %v1890 = vmul.f32 %v1858, %v1826
  %v1891 = vmul.f32 %v1859, %v1827
  %v1892 = vmul.f32 %v1860, %v1828
  %v1893 = vmul.f32 %v1861, %v1829
  %v1894 = vmul.f32 %v1862, %v1830
  %v1895 = vmul.f32 %v1863, %v1831
  %v1896 = vmul.f32 %v1864, %v1832
  %v1897 = vmul.f32 %v1865, %v1833
  %v1898 = vmul.f32 %v1866, %v1834
  %v1899 = vmul.f32 %v1867, %v1835
  %v1900 = vmul.f32 %v1868, %v1836
  %v1901 = vmul.f32 %v1869, %v1837
  %v1902 = vmul.f32 %v1870, %v1838
  %v1903 = vld [vmem:[%s2] sm:$0xff]
  %v1904 = vld [vmem:[%s2 + $0x8] sm:$0xff]
  %v1905 = vld [vmem:[%s2 + $0x10] sm:$0xff]
  %v1906 = vld [vmem:[%s2 + $0x18] sm:$0xff]
  %v1907 = vld [vmem:[%s2 + $0x20] sm:$0xff]
  %v1908 = vld [vmem:[%s2 + $0x28] sm:$0xff]
  %v1909 = vld [vmem:[%s2 + $0x30] sm:$0xff]
  %v1910 = vld [vmem:[%s2 + $0x38] sm:$0xff]
  %v1911 = vld [vmem:[%s2 + $0x40] sm:$0xff]
  %v1912 = vld [vmem:[%s2 + $0x48] sm:$0xff]
  %v1913 = vld [vmem:[%s2 + $0x50] sm:$0xff]
  %v1914 = vld [vmem:[%s2 + $0x58] sm:$0xff]
  %v1915 = vld [vmem:[%s2 + $0x60] sm:$0xff]
  %v1916 = vld [vmem:[%s2 + $0x68] sm:$0xff]
  %v1917 = vld [vmem:[%s2 + $0x70] sm:$0xff]
  %v1918 = vld [vmem:[%s2 + $0x78] sm:$0xff]
  %v1919 = vld [vmem:[%s2 + $0x80] sm:$0xff]
  %v1920 = vld [vmem:[%s2 + $0x88] sm:$0xff]
  %v1921 = vld [vmem:[%s2 + $0x90] sm:$0xff]
  %v1922 = vld [vmem:[%s2 + $0x98] sm:$0xff]
  %v1923 = vld [vmem:[%s2 + $0xa0] sm:$0xff]
  %v1924 = vld [vmem:[%s2 + $0xa8] sm:$0xff]
  %v1925 = vld [vmem:[%s2 + $0xb0] sm:$0xff]
  %v1926 = vld [vmem:[%s2 + $0xb8] sm:$0xff]
  %v1927 = vld [vmem:[%s2 + $0xc0] sm:$0xff]
  %v1928 = vld [vmem:[%s2 + $0xc8] sm:$0xff]
  %v1929 = vld [vmem:[%s2 + $0xd0] sm:$0xff]
  %v1930 = vld [vmem:[%s2 + $0xd8] sm:$0xff]
  %v1931 = vld [vmem:[%s2 + $0xe0] sm:$0xff]
  %v1932 = vld [vmem:[%s2 + $0xe8] sm:$0xff]
  %v1933 = vld [vmem:[%s2 + $0xf0] sm:$0xff]
  %v1934 = vld [vmem:[%s2 + $0xf8] sm:$0xff]
  %v1935 = vmul.f32 %v751, %v1871
  %v1936 = vmul.f32 %v752, %v1872
  %v1937 = vmul.f32 %v753, %v1873
  %v1938 = vmul.f32 %v754, %v1874
  %v1939 = vmul.f32 %v755, %v1875
  %v1940 = vmul.f32 %v756, %v1876
  %v1941 = vmul.f32 %v757, %v1877
  %v1942 = vmul.f32 %v758, %v1878
  %v1943 = vmul.f32 %v759, %v1879
  %v1944 = vmul.f32 %v760, %v1880
  %v1945 = vmul.f32 %v761, %v1881
  %v1946 = vmul.f32 %v762, %v1882
  %v1947 = vmul.f32 %v763, %v1883
  %v1948 = vmul.f32 %v764, %v1884
  %v1949 = vmul.f32 %v765, %v1885
  %v1950 = vmul.f32 %v766, %v1886
  %v1951 = vmul.f32 %v767, %v1887
  %v1952 = vmul.f32 %v768, %v1888
  %v1953 = vmul.f32 %v769, %v1889
  %v1954 = vmul.f32 %v770, %v1890
  %v1955 = vmul.f32 %v771, %v1891
  %v1956 = vmul.f32 %v772, %v1892
  %v1957 = vmul.f32 %v773, %v1893
  %v1958 = vmul.f32 %v774, %v1894
  %v1959 = vmul.f32 %v775, %v1895
  %v1960 = vmul.f32 %v776, %v1896
  %v1961 = vmul.f32 %v777, %v1897
  %v1962 = vmul.f32 %v778, %v1898
  %v1963 = vmul.f32 %v779, %v1899
  %v1964 = vmul.f32 %v780, %v1900
  %v1965 = vmul.f32 %v781, %v1901
  %v1966 = vmul.f32 %v782, %v1902
  %v1967 = vsub.f32 %v1903, %v1935
  %v1968 = vsub.f32 %v1904, %v1936
  %v1969 = vsub.f32 %v1905, %v1937
  %v1970 = vsub.f32 %v1906, %v1938
  %v1971 = vsub.f32 %v1907, %v1939
  %v1972 = vsub.f32 %v1908, %v1940
  %v1973 = vsub.f32 %v1909, %v1941
  %v1974 = vsub.f32 %v1910, %v1942
  %v1975 = vsub.f32 %v1911, %v1943
  %v1976 = vsub.f32 %v1912, %v1944
  %v1977 = vsub.f32 %v1913, %v1945
  %v1978 = vsub.f32 %v1914, %v1946
  %v1979 = vsub.f32 %v1915, %v1947
  %v1980 = vsub.f32 %v1916, %v1948
  %v1981 = vsub.f32 %v1917, %v1949
  %v1982 = vsub.f32 %v1918, %v1950
  %v1983 = vsub.f32 %v1919, %v1951
  %v1984 = vsub.f32 %v1920, %v1952
  %v1985 = vsub.f32 %v1921, %v1953
  %v1986 = vsub.f32 %v1922, %v1954
  %v1987 = vsub.f32 %v1923, %v1955
  %v1988 = vsub.f32 %v1924, %v1956
  %v1989 = vsub.f32 %v1925, %v1957
  %v1990 = vsub.f32 %v1926, %v1958
  %v1991 = vsub.f32 %v1927, %v1959
  %v1992 = vsub.f32 %v1928, %v1960
  %v1993 = vsub.f32 %v1929, %v1961
  %v1994 = vsub.f32 %v1930, %v1962
  %v1995 = vsub.f32 %v1931, %v1963
  %v1996 = vsub.f32 %v1932, %v1964
  %v1997 = vsub.f32 %v1933, %v1965
  %v1998 = vsub.f32 %v1934, %v1966
  %2000 = vset.pattern.permute.xlu0 0
  %2001 = vperm.xlu0 %2000, %v1871
  %v2002 = vpop.permute.xlu0 %2001
  %2005 = vset.pattern.permute.xlu0 0
  %2006 = vperm.xlu0 %2005, %v1872
  %v2007 = vpop.permute.xlu0 %2006
  %2010 = vset.pattern.permute.xlu0 0
  %2011 = vperm.xlu0 %2010, %v1873
  %v2012 = vpop.permute.xlu0 %2011
  %2015 = vset.pattern.permute.xlu0 0
  %2016 = vperm.xlu0 %2015, %v1874
  %v2017 = vpop.permute.xlu0 %2016
  %2020 = vset.pattern.permute.xlu0 0
  %2021 = vperm.xlu0 %2020, %v1875
  %v2022 = vpop.permute.xlu0 %2021
  %2025 = vset.pattern.permute.xlu0 0
  %2026 = vperm.xlu0 %2025, %v1876
  %v2027 = vpop.permute.xlu0 %2026
  %2030 = vset.pattern.permute.xlu0 0
  %2031 = vperm.xlu0 %2030, %v1877
  %v2032 = vpop.permute.xlu0 %2031
  %2035 = vset.pattern.permute.xlu0 0
  %2036 = vperm.xlu0 %2035, %v1878
  %v2037 = vpop.permute.xlu0 %2036
  %2040 = vset.pattern.permute.xlu0 0
  %2041 = vperm.xlu0 %2040, %v1879
  %v2042 = vpop.permute.xlu0 %2041
  %2045 = vset.pattern.permute.xlu0 0
  %2046 = vperm.xlu0 %2045, %v1880
  %v2047 = vpop.permute.xlu0 %2046
  %2050 = vset.pattern.permute.xlu0 0
  %2051 = vperm.xlu0 %2050, %v1881
  %v2052 = vpop.permute.xlu0 %2051
  %2055 = vset.pattern.permute.xlu0 0
  %2056 = vperm.xlu0 %2055, %v1882
  %v2057 = vpop.permute.xlu0 %2056
  %2060 = vset.pattern.permute.xlu0 0
  %2061 = vperm.xlu0 %2060, %v1883
  %v2062 = vpop.permute.xlu0 %2061
  %2065 = vset.pattern.permute.xlu0 0
  %2066 = vperm.xlu0 %2065, %v1884
  %v2067 = vpop.permute.xlu0 %2066
  %2070 = vset.pattern.permute.xlu0 0
  %2071 = vperm.xlu0 %2070, %v1885
  %v2072 = vpop.permute.xlu0 %2071
  %2075 = vset.pattern.permute.xlu0 0
  %2076 = vperm.xlu0 %2075, %v1886
  %v2077 = vpop.permute.xlu0 %2076
  %2080 = vset.pattern.permute.xlu0 0
  %2081 = vperm.xlu0 %2080, %v1887
  %v2082 = vpop.permute.xlu0 %2081
  %2085 = vset.pattern.permute.xlu0 0
  %2086 = vperm.xlu0 %2085, %v1888
  %v2087 = vpop.permute.xlu0 %2086
  %2090 = vset.pattern.permute.xlu0 0
  %2091 = vperm.xlu0 %2090, %v1889
  %v2092 = vpop.permute.xlu0 %2091
  %2095 = vset.pattern.permute.xlu0 0
  %2096 = vperm.xlu0 %2095, %v1890
  %v2097 = vpop.permute.xlu0 %2096
  %2100 = vset.pattern.permute.xlu0 0
  %2101 = vperm.xlu0 %2100, %v1891
  %v2102 = vpop.permute.xlu0 %2101
  %2105 = vset.pattern.permute.xlu0 0
  %2106 = vperm.xlu0 %2105, %v1892
  %v2107 = vpop.permute.xlu0 %2106
  %2110 = vset.pattern.permute.xlu0 0
  %2111 = vperm.xlu0 %2110, %v1893
  %v2112 = vpop.permute.xlu0 %2111
  %2115 = vset.pattern.permute.xlu0 0
  %2116 = vperm.xlu0 %2115, %v1894
  %v2117 = vpop.permute.xlu0 %2116
  %2120 = vset.pattern.permute.xlu0 0
  %2121 = vperm.xlu0 %2120, %v1895
  %v2122 = vpop.permute.xlu0 %2121
  %2125 = vset.pattern.permute.xlu0 0
  %2126 = vperm.xlu0 %2125, %v1896
  %v2127 = vpop.permute.xlu0 %2126
  %2130 = vset.pattern.permute.xlu0 0
  %2131 = vperm.xlu0 %2130, %v1897
  %v2132 = vpop.permute.xlu0 %2131
  %2135 = vset.pattern.permute.xlu0 0
  %2136 = vperm.xlu0 %2135, %v1898
  %v2137 = vpop.permute.xlu0 %2136
  %2140 = vset.pattern.permute.xlu0 0
  %2141 = vperm.xlu0 %2140, %v1899
  %v2142 = vpop.permute.xlu0 %2141
  %2145 = vset.pattern.permute.xlu0 0
  %2146 = vperm.xlu0 %2145, %v1900
  %v2147 = vpop.permute.xlu0 %2146
  %2150 = vset.pattern.permute.xlu0 0
  %2151 = vperm.xlu0 %2150, %v1901
  %v2152 = vpop.permute.xlu0 %2151
  %2155 = vset.pattern.permute.xlu0 0
  %2156 = vperm.xlu0 %2155, %v1902
  %v2157 = vpop.permute.xlu0 %2156
  %v2159 = vmul.f32 %v14, %v2002
  %v2160 = vmul.f32 %v15, %v2002
  %v2161 = vmul.f32 %v16, %v2002
  %v2162 = vmul.f32 %v17, %v2002
  %v2163 = vmul.f32 %v18, %v2002
  %v2164 = vmul.f32 %v19, %v2002
  %v2165 = vmul.f32 %v20, %v2002
  %v2166 = vmul.f32 %v21, %v2007
  %v2167 = vmul.f32 %v22, %v2007
  %v2168 = vmul.f32 %v23, %v2007
  %v2169 = vmul.f32 %v24, %v2007
  %v2170 = vmul.f32 %v25, %v2007
  %v2171 = vmul.f32 %v26, %v2007
  %v2172 = vmul.f32 %v27, %v2007
  %v2173 = vmul.f32 %v28, %v2012
  %v2174 = vmul.f32 %v29, %v2012
  %v2175 = vmul.f32 %v30, %v2012
  %v2176 = vmul.f32 %v31, %v2012
  %v2177 = vmul.f32 %v32, %v2012
  %v2178 = vmul.f32 %v33, %v2012
  %v2179 = vmul.f32 %v34, %v2012
  %v2180 = vmul.f32 %v35, %v2017
  %v2181 = vmul.f32 %v36, %v2017
  %v2182 = vmul.f32 %v37, %v2017
  %v2183 = vmul.f32 %v38, %v2017
  %v2184 = vmul.f32 %v39, %v2017
  %v2185 = vmul.f32 %v40, %v2017
  %v2186 = vmul.f32 %v41, %v2017
  %v2187 = vmul.f32 %v42, %v2022
  %v2188 = vmul.f32 %v43, %v2022
  %v2189 = vmul.f32 %v44, %v2022
  %v2190 = vmul.f32 %v45, %v2022
  %v2191 = vmul.f32 %v46, %v2022
  %v2192 = vmul.f32 %v47, %v2022
  %v2193 = vmul.f32 %v48, %v2022
  %v2194 = vmul.f32 %v49, %v2027
  %v2195 = vmul.f32 %v50, %v2027
  %v2196 = vmul.f32 %v51, %v2027
  %v2197 = vmul.f32 %v52, %v2027
  %v2198 = vmul.f32 %v53, %v2027
  %v2199 = vmul.f32 %v54, %v2027
  %v2200 = vmul.f32 %v55, %v2027
  %v2201 = vmul.f32 %v56, %v2032
  %v2202 = vmul.f32 %v57, %v2032
  %v2203 = vmul.f32 %v58, %v2032
  %v2204 = vmul.f32 %v59, %v2032
  %v2205 = vmul.f32 %v60, %v2032
  %v2206 = vmul.f32 %v61, %v2032
  %v2207 = vmul.f32 %v62, %v2032
  %v2208 = vmul.f32 %v63, %v2037
  %v2209 = vmul.f32 %v64, %v2037
  %v2210 = vmul.f32 %v65, %v2037
  %v2211 = vmul.f32 %v66, %v2037
  %v2212 = vmul.f32 %v67, %v2037
  %v2213 = vmul.f32 %v68, %v2037
  %v2214 = vmul.f32 %v69, %v2037
  %v2215 = vmul.f32 %v70, %v2042
  %v2216 = vmul.f32 %v71, %v2042
  %v2217 = vmul.f32 %v72, %v2042
  %v2218 = vmul.f32 %v73, %v2042
  %v2219 = vmul.f32 %v74, %v2042
  %v2220 = vmul.f32 %v75, %v2042
  %v2221 = vmul.f32 %v76, %v2042
  %v2222 = vmul.f32 %v77, %v2047
  %v2223 = vmul.f32 %v78, %v2047
  %v2224 = vmul.f32 %v79, %v2047
  %v2225 = vmul.f32 %v80, %v2047
  %v2226 = vmul.f32 %v81, %v2047
  %v2227 = vmul.f32 %v82, %v2047
  %v2228 = vmul.f32 %v83, %v2047
  %v2229 = vmul.f32 %v84, %v2052
  %v2230 = vmul.f32 %v85, %v2052
  %v2231 = vmul.f32 %v86, %v2052
  %v2232 = vmul.f32 %v87, %v2052
  %v2233 = vmul.f32 %v88, %v2052
  %v2234 = vmul.f32 %v89, %v2052
  %v2235 = vmul.f32 %v90, %v2052
  %v2236 = vmul.f32 %v91, %v2057
  %v2237 = vmul.f32 %v92, %v2057
  %v2238 = vmul.f32 %v93, %v2057
  %v2239 = vmul.f32 %v94, %v2057
  %v2240 = vmul.f32 %v95, %v2057
  %v2241 = vmul.f32 %v96, %v2057
  %v2242 = vmul.f32 %v97, %v2057
  %v2243 = vmul.f32 %v98, %v2062
  %v2244 = vmul.f32 %v99, %v2062
  %v2245 = vmul.f32 %v100, %v2062
  %v2246 = vmul.f32 %v101, %v2062
  %v2247 = vmul.f32 %v102, %v2062
  %v2248 = vmul.f32 %v103, %v2062
  %v2249 = vmul.f32 %v104, %v2062
  %v2250 = vmul.f32 %v105, %v2067
  %v2251 = vmul.f32 %v106, %v2067
  %v2252 = vmul.f32 %v107, %v2067
  %v2253 = vmul.f32 %v108, %v2067
  %v2254 = vmul.f32 %v109, %v2067
  %v2255 = vmul.f32 %v110, %v2067
  %v2256 = vmul.f32 %v111, %v2067
  %v2257 = vmul.f32 %v112, %v2072
  %v2258 = vmul.f32 %v113, %v2072
  %v2259 = vmul.f32 %v114, %v2072
  %v2260 = vmul.f32 %v115, %v2072
  %v2261 = vmul.f32 %v116, %v2072
  %v2262 = vmul.f32 %v117, %v2072
  %v2263 = vmul.f32 %v118, %v2072
  %v2264 = vmul.f32 %v119, %v2077
  %v2265 = vmul.f32 %v120, %v2077
  %v2266 = vmul.f32 %v121, %v2077
  %v2267 = vmul.f32 %v122, %v2077
  %v2268 = vmul.f32 %v123, %v2077
  %v2269 = vmul.f32 %v124, %v2077
  %v2270 = vmul.f32 %v125, %v2077
  %v2271 = vmul.f32 %v126, %v2082
  %v2272 = vmul.f32 %v127, %v2082
  %v2273 = vmul.f32 %v128, %v2082
  %v2274 = vmul.f32 %v129, %v2082
  %v2275 = vmul.f32 %v130, %v2082
  %v2276 = vmul.f32 %v131, %v2082
  %v2277 = vmul.f32 %v132, %v2082
  %v2278 = vmul.f32 %v133, %v2087
  %v2279 = vmul.f32 %v134, %v2087
  %v2280 = vmul.f32 %v135, %v2087
  %v2281 = vmul.f32 %v136, %v2087
  %v2282 = vmul.f32 %v137, %v2087
  %v2283 = vmul.f32 %v138, %v2087
  %v2284 = vmul.f32 %v139, %v2087
  %v2285 = vmul.f32 %v140, %v2092
  %v2286 = vmul.f32 %v141, %v2092
  %v2287 = vmul.f32 %v142, %v2092
  %v2288 = vmul.f32 %v143, %v2092
  %v2289 = vmul.f32 %v144, %v2092
  %v2290 = vmul.f32 %v145, %v2092
  %v2291 = vmul.f32 %v146, %v2092
  %v2292 = vmul.f32 %v147, %v2097
  %v2293 = vmul.f32 %v148, %v2097
  %v2294 = vmul.f32 %v149, %v2097
  %v2295 = vmul.f32 %v150, %v2097
  %v2296 = vmul.f32 %v151, %v2097
  %v2297 = vmul.f32 %v152, %v2097
  %v2298 = vmul.f32 %v153, %v2097
  %v2299 = vmul.f32 %v154, %v2102
  %v2300 = vmul.f32 %v155, %v2102
  %v2301 = vmul.f32 %v156, %v2102
  %v2302 = vmul.f32 %v157, %v2102
  %v2303 = vmul.f32 %v158, %v2102
  %v2304 = vmul.f32 %v159, %v2102
  %v2305 = vmul.f32 %v160, %v2102
  %v2306 = vmul.f32 %v161, %v2107
  %v2307 = vmul.f32 %v162, %v2107
  %v2308 = vmul.f32 %v163, %v2107
  %v2309 = vmul.f32 %v164, %v2107
  %v2310 = vmul.f32 %v165, %v2107
  %v2311 = vmul.f32 %v166, %v2107
  %v2312 = vmul.f32 %v167, %v2107
  %v2313 = vmul.f32 %v168, %v2112
  %v2314 = vmul.f32 %v169, %v2112
  %v2315 = vmul.f32 %v170, %v2112
  %v2316 = vmul.f32 %v171, %v2112
  %v2317 = vmul.f32 %v172, %v2112
  %v2318 = vmul.f32 %v173, %v2112
  %v2319 = vmul.f32 %v174, %v2112
  %v2320 = vmul.f32 %v175, %v2117
  %v2321 = vmul.f32 %v176, %v2117
  %v2322 = vmul.f32 %v177, %v2117
  %v2323 = vmul.f32 %v178, %v2117
  %v2324 = vmul.f32 %v179, %v2117
  %v2325 = vmul.f32 %v180, %v2117
  %v2326 = vmul.f32 %v181, %v2117
  %v2327 = vmul.f32 %v182, %v2122
  %v2328 = vmul.f32 %v183, %v2122
  %v2329 = vmul.f32 %v184, %v2122
  %v2330 = vmul.f32 %v185, %v2122
  %v2331 = vmul.f32 %v186, %v2122
  %v2332 = vmul.f32 %v187, %v2122
  %v2333 = vmul.f32 %v188, %v2122
  %v2334 = vmul.f32 %v189, %v2127
  %v2335 = vmul.f32 %v190, %v2127
  %v2336 = vmul.f32 %v191, %v2127
  %v2337 = vmul.f32 %v192, %v2127
  %v2338 = vmul.f32 %v193, %v2127
  %v2339 = vmul.f32 %v194, %v2127
  %v2340 = vmul.f32 %v195, %v2127
  %v2341 = vmul.f32 %v196, %v2132
  %v2342 = vmul.f32 %v197, %v2132
  %v2343 = vmul.f32 %v198, %v2132
  %v2344 = vmul.f32 %v199, %v2132
  %v2345 = vmul.f32 %v200, %v2132
  %v2346 = vmul.f32 %v201, %v2132
  %v2347 = vmul.f32 %v202, %v2132
  %v2348 = vmul.f32 %v203, %v2137
  %v2349 = vmul.f32 %v204, %v2137
  %v2350 = vmul.f32 %v205, %v2137
  %v2351 = vmul.f32 %v206, %v2137
  %v2352 = vmul.f32 %v207, %v2137
  %v2353 = vmul.f32 %v208, %v2137
  %v2354 = vmul.f32 %v209, %v2137
  %v2355 = vmul.f32 %v210, %v2142
  %v2356 = vmul.f32 %v211, %v2142
  %v2357 = vmul.f32 %v212, %v2142
  %v2358 = vmul.f32 %v213, %v2142
  %v2359 = vmul.f32 %v214, %v2142
  %v2360 = vmul.f32 %v215, %v2142
  %v2361 = vmul.f32 %v216, %v2142
  %v2362 = vmul.f32 %v217, %v2147
  %v2363 = vmul.f32 %v218, %v2147
  %v2364 = vmul.f32 %v219, %v2147
  %v2365 = vmul.f32 %v220, %v2147
  %v2366 = vmul.f32 %v221, %v2147
  %v2367 = vmul.f32 %v222, %v2147
  %v2368 = vmul.f32 %v223, %v2147
  %v2369 = vmul.f32 %v224, %v2152
  %v2370 = vmul.f32 %v225, %v2152
  %v2371 = vmul.f32 %v226, %v2152
  %v2372 = vmul.f32 %v227, %v2152
  %v2373 = vmul.f32 %v228, %v2152
  %v2374 = vmul.f32 %v229, %v2152
  %v2375 = vmul.f32 %v230, %v2152
  %v2376 = vmul.f32 %v231, %v2157
  %v2377 = vmul.f32 %v232, %v2157
  %v2378 = vmul.f32 %v233, %v2157
  %v2379 = vmul.f32 %v234, %v2157
  %v2380 = vmul.f32 %v235, %v2157
  %v2381 = vmul.f32 %v236, %v2157
  %v2382 = vmul.f32 %v237, %v2157
  %2384 = vset.pattern.permute.xlu0 0
  %2385 = vperm.xlu0 %2384, %v1967
  %v2386 = vpop.permute.xlu0 %2385
  %2389 = vset.pattern.permute.xlu0 0
  %2390 = vperm.xlu0 %2389, %v1968
  %v2391 = vpop.permute.xlu0 %2390
  %2394 = vset.pattern.permute.xlu0 0
  %2395 = vperm.xlu0 %2394, %v1969
  %v2396 = vpop.permute.xlu0 %2395
  %2399 = vset.pattern.permute.xlu0 0
  %2400 = vperm.xlu0 %2399, %v1970
  %v2401 = vpop.permute.xlu0 %2400
  %2404 = vset.pattern.permute.xlu0 0
  %2405 = vperm.xlu0 %2404, %v1971
  %v2406 = vpop.permute.xlu0 %2405
  %2409 = vset.pattern.permute.xlu0 0
  %2410 = vperm.xlu0 %2409, %v1972
  %v2411 = vpop.permute.xlu0 %2410
  %2414 = vset.pattern.permute.xlu0 0
  %2415 = vperm.xlu0 %2414, %v1973
  %v2416 = vpop.permute.xlu0 %2415
  %2419 = vset.pattern.permute.xlu0 0
  %2420 = vperm.xlu0 %2419, %v1974
  %v2421 = vpop.permute.xlu0 %2420
  %2424 = vset.pattern.permute.xlu0 0
  %2425 = vperm.xlu0 %2424, %v1975
  %v2426 = vpop.permute.xlu0 %2425
  %2429 = vset.pattern.permute.xlu0 0
  %2430 = vperm.xlu0 %2429, %v1976
  %v2431 = vpop.permute.xlu0 %2430
  %2434 = vset.pattern.permute.xlu0 0
  %2435 = vperm.xlu0 %2434, %v1977
  %v2436 = vpop.permute.xlu0 %2435
  %2439 = vset.pattern.permute.xlu0 0
  %2440 = vperm.xlu0 %2439, %v1978
  %v2441 = vpop.permute.xlu0 %2440
  %2444 = vset.pattern.permute.xlu0 0
  %2445 = vperm.xlu0 %2444, %v1979
  %v2446 = vpop.permute.xlu0 %2445
  %2449 = vset.pattern.permute.xlu0 0
  %2450 = vperm.xlu0 %2449, %v1980
  %v2451 = vpop.permute.xlu0 %2450
  %2454 = vset.pattern.permute.xlu0 0
  %2455 = vperm.xlu0 %2454, %v1981
  %v2456 = vpop.permute.xlu0 %2455
  %2459 = vset.pattern.permute.xlu0 0
  %2460 = vperm.xlu0 %2459, %v1982
  %v2461 = vpop.permute.xlu0 %2460
  %2464 = vset.pattern.permute.xlu0 0
  %2465 = vperm.xlu0 %2464, %v1983
  %v2466 = vpop.permute.xlu0 %2465
  %2469 = vset.pattern.permute.xlu0 0
  %2470 = vperm.xlu0 %2469, %v1984
  %v2471 = vpop.permute.xlu0 %2470
  %2474 = vset.pattern.permute.xlu0 0
  %2475 = vperm.xlu0 %2474, %v1985
  %v2476 = vpop.permute.xlu0 %2475
  %2479 = vset.pattern.permute.xlu0 0
  %2480 = vperm.xlu0 %2479, %v1986
  %v2481 = vpop.permute.xlu0 %2480
  %2484 = vset.pattern.permute.xlu0 0
  %2485 = vperm.xlu0 %2484, %v1987
  %v2486 = vpop.permute.xlu0 %2485
  %2489 = vset.pattern.permute.xlu0 0
  %2490 = vperm.xlu0 %2489, %v1988
  %v2491 = vpop.permute.xlu0 %2490
  %2494 = vset.pattern.permute.xlu0 0
  %2495 = vperm.xlu0 %2494, %v1989
  %v2496 = vpop.permute.xlu0 %2495
  %2499 = vset.pattern.permute.xlu0 0
  %2500 = vperm.xlu0 %2499, %v1990
  %v2501 = vpop.permute.xlu0 %2500
  %2504 = vset.pattern.permute.xlu0 0
  %2505 = vperm.xlu0 %2504, %v1991
  %v2506 = vpop.permute.xlu0 %2505
  %2509 = vset.pattern.permute.xlu0 0
  %2510 = vperm.xlu0 %2509, %v1992
  %v2511 = vpop.permute.xlu0 %2510
  %2514 = vset.pattern.permute.xlu0 0
  %2515 = vperm.xlu0 %2514, %v1993
  %v2516 = vpop.permute.xlu0 %2515
  %2519 = vset.pattern.permute.xlu0 0
  %2520 = vperm.xlu0 %2519, %v1994
  %v2521 = vpop.permute.xlu0 %2520
  %2524 = vset.pattern.permute.xlu0 0
  %2525 = vperm.xlu0 %2524, %v1995
  %v2526 = vpop.permute.xlu0 %2525
  %2529 = vset.pattern.permute.xlu0 0
  %2530 = vperm.xlu0 %2529, %v1996
  %v2531 = vpop.permute.xlu0 %2530
  %2534 = vset.pattern.permute.xlu0 0
  %2535 = vperm.xlu0 %2534, %v1997
  %v2536 = vpop.permute.xlu0 %2535
  %2539 = vset.pattern.permute.xlu0 0
  %2540 = vperm.xlu0 %2539, %v1998
  %v2541 = vpop.permute.xlu0 %2540
  %v2543 = vadd.f32 %v2159, %v2386
  %v2544 = vadd.f32 %v2160, %v2386
  %v2545 = vadd.f32 %v2161, %v2386
  %v2546 = vadd.f32 %v2162, %v2386
  %v2547 = vadd.f32 %v2163, %v2386
  %v2548 = vadd.f32 %v2164, %v2386
  %v2549 = vadd.f32 %v2165, %v2386
  %v2550 = vadd.f32 %v2166, %v2391
  %v2551 = vadd.f32 %v2167, %v2391
  %v2552 = vadd.f32 %v2168, %v2391
  %v2553 = vadd.f32 %v2169, %v2391
  %v2554 = vadd.f32 %v2170, %v2391
  %v2555 = vadd.f32 %v2171, %v2391
  %v2556 = vadd.f32 %v2172, %v2391
  %v2557 = vadd.f32 %v2173, %v2396
  %v2558 = vadd.f32 %v2174, %v2396
  %v2559 = vadd.f32 %v2175, %v2396
  %v2560 = vadd.f32 %v2176, %v2396
  %v2561 = vadd.f32 %v2177, %v2396
  %v2562 = vadd.f32 %v2178, %v2396
  %v2563 = vadd.f32 %v2179, %v2396
  %v2564 = vadd.f32 %v2180, %v2401
  %v2565 = vadd.f32 %v2181, %v2401
  %v2566 = vadd.f32 %v2182, %v2401
  %v2567 = vadd.f32 %v2183, %v2401
  %v2568 = vadd.f32 %v2184, %v2401
  %v2569 = vadd.f32 %v2185, %v2401
  %v2570 = vadd.f32 %v2186, %v2401
  %v2571 = vadd.f32 %v2187, %v2406
  %v2572 = vadd.f32 %v2188, %v2406
  %v2573 = vadd.f32 %v2189, %v2406
  %v2574 = vadd.f32 %v2190, %v2406
  %v2575 = vadd.f32 %v2191, %v2406
  %v2576 = vadd.f32 %v2192, %v2406
  %v2577 = vadd.f32 %v2193, %v2406
  %v2578 = vadd.f32 %v2194, %v2411
  %v2579 = vadd.f32 %v2195, %v2411
  %v2580 = vadd.f32 %v2196, %v2411
  %v2581 = vadd.f32 %v2197, %v2411
  %v2582 = vadd.f32 %v2198, %v2411
  %v2583 = vadd.f32 %v2199, %v2411
  %v2584 = vadd.f32 %v2200, %v2411
  %v2585 = vadd.f32 %v2201, %v2416
  %v2586 = vadd.f32 %v2202, %v2416
  %v2587 = vadd.f32 %v2203, %v2416
  %v2588 = vadd.f32 %v2204, %v2416
  %v2589 = vadd.f32 %v2205, %v2416
  %v2590 = vadd.f32 %v2206, %v2416
  %v2591 = vadd.f32 %v2207, %v2416
  %v2592 = vadd.f32 %v2208, %v2421
  %v2593 = vadd.f32 %v2209, %v2421
  %v2594 = vadd.f32 %v2210, %v2421
  %v2595 = vadd.f32 %v2211, %v2421
  %v2596 = vadd.f32 %v2212, %v2421
  %v2597 = vadd.f32 %v2213, %v2421
  %v2598 = vadd.f32 %v2214, %v2421
  %v2599 = vadd.f32 %v2215, %v2426
  %v2600 = vadd.f32 %v2216, %v2426
  %v2601 = vadd.f32 %v2217, %v2426
  %v2602 = vadd.f32 %v2218, %v2426
  %v2603 = vadd.f32 %v2219, %v2426
  %v2604 = vadd.f32 %v2220, %v2426
  %v2605 = vadd.f32 %v2221, %v2426
  %v2606 = vadd.f32 %v2222, %v2431
  %v2607 = vadd.f32 %v2223, %v2431
  %v2608 = vadd.f32 %v2224, %v2431
  %v2609 = vadd.f32 %v2225, %v2431
  %v2610 = vadd.f32 %v2226, %v2431
  %v2611 = vadd.f32 %v2227, %v2431
  %v2612 = vadd.f32 %v2228, %v2431
  %v2613 = vadd.f32 %v2229, %v2436
  %v2614 = vadd.f32 %v2230, %v2436
  %v2615 = vadd.f32 %v2231, %v2436
  %v2616 = vadd.f32 %v2232, %v2436
  %v2617 = vadd.f32 %v2233, %v2436
  %v2618 = vadd.f32 %v2234, %v2436
  %v2619 = vadd.f32 %v2235, %v2436
  %v2620 = vadd.f32 %v2236, %v2441
  %v2621 = vadd.f32 %v2237, %v2441
  %v2622 = vadd.f32 %v2238, %v2441
  %v2623 = vadd.f32 %v2239, %v2441
  %v2624 = vadd.f32 %v2240, %v2441
  %v2625 = vadd.f32 %v2241, %v2441
  %v2626 = vadd.f32 %v2242, %v2441
  %v2627 = vadd.f32 %v2243, %v2446
  %v2628 = vadd.f32 %v2244, %v2446
  %v2629 = vadd.f32 %v2245, %v2446
  %v2630 = vadd.f32 %v2246, %v2446
  %v2631 = vadd.f32 %v2247, %v2446
  %v2632 = vadd.f32 %v2248, %v2446
  %v2633 = vadd.f32 %v2249, %v2446
  %v2634 = vadd.f32 %v2250, %v2451
  %v2635 = vadd.f32 %v2251, %v2451
  %v2636 = vadd.f32 %v2252, %v2451
  %v2637 = vadd.f32 %v2253, %v2451
  %v2638 = vadd.f32 %v2254, %v2451
  %v2639 = vadd.f32 %v2255, %v2451
  %v2640 = vadd.f32 %v2256, %v2451
  %v2641 = vadd.f32 %v2257, %v2456
  %v2642 = vadd.f32 %v2258, %v2456
  %v2643 = vadd.f32 %v2259, %v2456
  %v2644 = vadd.f32 %v2260, %v2456
  %v2645 = vadd.f32 %v2261, %v2456
  %v2646 = vadd.f32 %v2262, %v2456
  %v2647 = vadd.f32 %v2263, %v2456
  %v2648 = vadd.f32 %v2264, %v2461
  %v2649 = vadd.f32 %v2265, %v2461
  %v2650 = vadd.f32 %v2266, %v2461
  %v2651 = vadd.f32 %v2267, %v2461
  %v2652 = vadd.f32 %v2268, %v2461
  %v2653 = vadd.f32 %v2269, %v2461
  %v2654 = vadd.f32 %v2270, %v2461
  %v2655 = vadd.f32 %v2271, %v2466
  %v2656 = vadd.f32 %v2272, %v2466
  %v2657 = vadd.f32 %v2273, %v2466
  %v2658 = vadd.f32 %v2274, %v2466
  %v2659 = vadd.f32 %v2275, %v2466
  %v2660 = vadd.f32 %v2276, %v2466
  %v2661 = vadd.f32 %v2277, %v2466
  %v2662 = vadd.f32 %v2278, %v2471
  %v2663 = vadd.f32 %v2279, %v2471
  %v2664 = vadd.f32 %v2280, %v2471
  %v2665 = vadd.f32 %v2281, %v2471
  %v2666 = vadd.f32 %v2282, %v2471
  %v2667 = vadd.f32 %v2283, %v2471
  %v2668 = vadd.f32 %v2284, %v2471
  %v2669 = vadd.f32 %v2285, %v2476
  %v2670 = vadd.f32 %v2286, %v2476
  %v2671 = vadd.f32 %v2287, %v2476
  %v2672 = vadd.f32 %v2288, %v2476
  %v2673 = vadd.f32 %v2289, %v2476
  %v2674 = vadd.f32 %v2290, %v2476
  %v2675 = vadd.f32 %v2291, %v2476
  %v2676 = vadd.f32 %v2292, %v2481
  %v2677 = vadd.f32 %v2293, %v2481
  %v2678 = vadd.f32 %v2294, %v2481
  %v2679 = vadd.f32 %v2295, %v2481
  %v2680 = vadd.f32 %v2296, %v2481
  %v2681 = vadd.f32 %v2297, %v2481
  %v2682 = vadd.f32 %v2298, %v2481
  %v2683 = vadd.f32 %v2299, %v2486
  %v2684 = vadd.f32 %v2300, %v2486
  %v2685 = vadd.f32 %v2301, %v2486
  %v2686 = vadd.f32 %v2302, %v2486
  %v2687 = vadd.f32 %v2303, %v2486
  %v2688 = vadd.f32 %v2304, %v2486
  %v2689 = vadd.f32 %v2305, %v2486
  %v2690 = vadd.f32 %v2306, %v2491
  %v2691 = vadd.f32 %v2307, %v2491
  %v2692 = vadd.f32 %v2308, %v2491
  %v2693 = vadd.f32 %v2309, %v2491
  %v2694 = vadd.f32 %v2310, %v2491
  %v2695 = vadd.f32 %v2311, %v2491
  %v2696 = vadd.f32 %v2312, %v2491
  %v2697 = vadd.f32 %v2313, %v2496
  %v2698 = vadd.f32 %v2314, %v2496
  %v2699 = vadd.f32 %v2315, %v2496
  %v2700 = vadd.f32 %v2316, %v2496
  %v2701 = vadd.f32 %v2317, %v2496
  %v2702 = vadd.f32 %v2318, %v2496
  %v2703 = vadd.f32 %v2319, %v2496
  %v2704 = vadd.f32 %v2320, %v2501
  %v2705 = vadd.f32 %v2321, %v2501
  %v2706 = vadd.f32 %v2322, %v2501
  %v2707 = vadd.f32 %v2323, %v2501
  %v2708 = vadd.f32 %v2324, %v2501
  %v2709 = vadd.f32 %v2325, %v2501
  %v2710 = vadd.f32 %v2326, %v2501
  %v2711 = vadd.f32 %v2327, %v2506
  %v2712 = vadd.f32 %v2328, %v2506
  %v2713 = vadd.f32 %v2329, %v2506
  %v2714 = vadd.f32 %v2330, %v2506
  %v2715 = vadd.f32 %v2331, %v2506
  %v2716 = vadd.f32 %v2332, %v2506
  %v2717 = vadd.f32 %v2333, %v2506
  %v2718 = vadd.f32 %v2334, %v2511
  %v2719 = vadd.f32 %v2335, %v2511
  %v2720 = vadd.f32 %v2336, %v2511
  %v2721 = vadd.f32 %v2337, %v2511
  %v2722 = vadd.f32 %v2338, %v2511
  %v2723 = vadd.f32 %v2339, %v2511
  %v2724 = vadd.f32 %v2340, %v2511
  %v2725 = vadd.f32 %v2341, %v2516
  %v2726 = vadd.f32 %v2342, %v2516
  %v2727 = vadd.f32 %v2343, %v2516
  %v2728 = vadd.f32 %v2344, %v2516
  %v2729 = vadd.f32 %v2345, %v2516
  %v2730 = vadd.f32 %v2346, %v2516
  %v2731 = vadd.f32 %v2347, %v2516
  %v2732 = vadd.f32 %v2348, %v2521
  %v2733 = vadd.f32 %v2349, %v2521
  %v2734 = vadd.f32 %v2350, %v2521
  %v2735 = vadd.f32 %v2351, %v2521
  %v2736 = vadd.f32 %v2352, %v2521
  %v2737 = vadd.f32 %v2353, %v2521
  %v2738 = vadd.f32 %v2354, %v2521
  %v2739 = vadd.f32 %v2355, %v2526
  %v2740 = vadd.f32 %v2356, %v2526
  %v2741 = vadd.f32 %v2357, %v2526
  %v2742 = vadd.f32 %v2358, %v2526
  %v2743 = vadd.f32 %v2359, %v2526
  %v2744 = vadd.f32 %v2360, %v2526
  %v2745 = vadd.f32 %v2361, %v2526
  %v2746 = vadd.f32 %v2362, %v2531
  %v2747 = vadd.f32 %v2363, %v2531
  %v2748 = vadd.f32 %v2364, %v2531
  %v2749 = vadd.f32 %v2365, %v2531
  %v2750 = vadd.f32 %v2366, %v2531
  %v2751 = vadd.f32 %v2367, %v2531
  %v2752 = vadd.f32 %v2368, %v2531
  %v2753 = vadd.f32 %v2369, %v2536
  %v2754 = vadd.f32 %v2370, %v2536
  %v2755 = vadd.f32 %v2371, %v2536
  %v2756 = vadd.f32 %v2372, %v2536
  %v2757 = vadd.f32 %v2373, %v2536
  %v2758 = vadd.f32 %v2374, %v2536
  %v2759 = vadd.f32 %v2375, %v2536
  %v2760 = vadd.f32 %v2376, %v2541
  %v2761 = vadd.f32 %v2377, %v2541
  %v2762 = vadd.f32 %v2378, %v2541
  %v2763 = vadd.f32 %v2379, %v2541
  %v2764 = vadd.f32 %v2380, %v2541
  %v2765 = vadd.f32 %v2381, %v2541
  %v2766 = vadd.f32 %v2382, %v2541
  %v2767 = vmax.f32 %v2543, 0.0
  %v2768 = vmax.f32 %v2544, 0.0
  %v2769 = vmax.f32 %v2545, 0.0
  %v2770 = vmax.f32 %v2546, 0.0
  %v2771 = vmax.f32 %v2547, 0.0
  %v2772 = vmax.f32 %v2548, 0.0
  %v2773 = vmax.f32 %v2549, 0.0
  %v2774 = vmax.f32 %v2550, 0.0
  %v2775 = vmax.f32 %v2551, 0.0
  %v2776 = vmax.f32 %v2552, 0.0
  %v2777 = vmax.f32 %v2553, 0.0
  %v2778 = vmax.f32 %v2554, 0.0
  %v2779 = vmax.f32 %v2555, 0.0
  %v2780 = vmax.f32 %v2556, 0.0
  %v2781 = vmax.f32 %v2557, 0.0
  %v2782 = vmax.f32 %v2558, 0.0
  %v2783 = vmax.f32 %v2559, 0.0
  %v2784 = vmax.f32 %v2560, 0.0
  %v2785 = vmax.f32 %v2561, 0.0
  %v2786 = vmax.f32 %v2562, 0.0
  %v2787 = vmax.f32 %v2563, 0.0
  %v2788 = vmax.f32 %v2564, 0.0
  %v2789 = vmax.f32 %v2565, 0.0
  %v2790 = vmax.f32 %v2566, 0.0
  %v2791 = vmax.f32 %v2567, 0.0
  %v2792 = vmax.f32 %v2568, 0.0
  %v2793 = vmax.f32 %v2569, 0.0
  %v2794 = vmax.f32 %v2570, 0.0
  %v2795 = vmax.f32 %v2571, 0.0
  %v2796 = vmax.f32 %v2572, 0.0
  %v2797 = vmax.f32 %v2573, 0.0
  %v2798 = vmax.f32 %v2574, 0.0
  %v2799 = vmax.f32 %v2575, 0.0
  %v2800 = vmax.f32 %v2576, 0.0
  %v2801 = vmax.f32 %v2577, 0.0
  %v2802 = vmax.f32 %v2578, 0.0
  %v2803 = vmax.f32 %v2579, 0.0
  %v2804 = vmax.f32 %v2580, 0.0
  %v2805 = vmax.f32 %v2581, 0.0
  %v2806 = vmax.f32 %v2582, 0.0
  %v2807 = vmax.f32 %v2583, 0.0
  %v2808 = vmax.f32 %v2584, 0.0
  %v2809 = vmax.f32 %v2585, 0.0
  %v2810 = vmax.f32 %v2586, 0.0
  %v2811 = vmax.f32 %v2587, 0.0
  %v2812 = vmax.f32 %v2588, 0.0
  %v2813 = vmax.f32 %v2589, 0.0
  %v2814 = vmax.f32 %v2590, 0.0
  %v2815 = vmax.f32 %v2591, 0.0
  %v2816 = vmax.f32 %v2592, 0.0
  %v2817 = vmax.f32 %v2593, 0.0
  %v2818 = vmax.f32 %v2594, 0.0
  %v2819 = vmax.f32 %v2595, 0.0
  %v2820 = vmax.f32 %v2596, 0.0
  %v2821 = vmax.f32 %v2597, 0.0
  %v2822 = vmax.f32 %v2598, 0.0
  %v2823 = vmax.f32 %v2599, 0.0
  %v2824 = vmax.f32 %v2600, 0.0
  %v2825 = vmax.f32 %v2601, 0.0
  %v2826 = vmax.f32 %v2602, 0.0
  %v2827 = vmax.f32 %v2603, 0.0
  %v2828 = vmax.f32 %v2604, 0.0
  %v2829 = vmax.f32 %v2605, 0.0
  %v2830 = vmax.f32 %v2606, 0.0
  %v2831 = vmax.f32 %v2607, 0.0
  %v2832 = vmax.f32 %v2608, 0.0
  %v2833 = vmax.f32 %v2609, 0.0
  %v2834 = vmax.f32 %v2610, 0.0
  %v2835 = vmax.f32 %v2611, 0.0
  %v2836 = vmax.f32 %v2612, 0.0
  %v2837 = vmax.f32 %v2613, 0.0
  %v2838 = vmax.f32 %v2614, 0.0
  %v2839 = vmax.f32 %v2615, 0.0
  %v2840 = vmax.f32 %v2616, 0.0
  %v2841 = vmax.f32 %v2617, 0.0
  %v2842 = vmax.f32 %v2618, 0.0
  %v2843 = vmax.f32 %v2619, 0.0
  %v2844 = vmax.f32 %v2620, 0.0
  %v2845 = vmax.f32 %v2621, 0.0
  %v2846 = vmax.f32 %v2622, 0.0
  %v2847 = vmax.f32 %v2623, 0.0
  %v2848 = vmax.f32 %v2624, 0.0
  %v2849 = vmax.f32 %v2625, 0.0
  %v2850 = vmax.f32 %v2626, 0.0
  %v2851 = vmax.f32 %v2627, 0.0
  %v2852 = vmax.f32 %v2628, 0.0
  %v2853 = vmax.f32 %v2629, 0.0
  %v2854 = vmax.f32 %v2630, 0.0
  %v2855 = vmax.f32 %v2631, 0.0
  %v2856 = vmax.f32 %v2632, 0.0
  %v2857 = vmax.f32 %v2633, 0.0
  %v2858 = vmax.f32 %v2634, 0.0
  %v2859 = vmax.f32 %v2635, 0.0
  %v2860 = vmax.f32 %v2636, 0.0
  %v2861 = vmax.f32 %v2637, 0.0
  %v2862 = vmax.f32 %v2638, 0.0
  %v2863 = vmax.f32 %v2639, 0.0
  %v2864 = vmax.f32 %v2640, 0.0
  %v2865 = vmax.f32 %v2641, 0.0
  %v2866 = vmax.f32 %v2642, 0.0
  %v2867 = vmax.f32 %v2643, 0.0
  %v2868 = vmax.f32 %v2644, 0.0
  %v2869 = vmax.f32 %v2645, 0.0
  %v2870 = vmax.f32 %v2646, 0.0
  %v2871 = vmax.f32 %v2647, 0.0
  %v2872 = vmax.f32 %v2648, 0.0
  %v2873 = vmax.f32 %v2649, 0.0
  %v2874 = vmax.f32 %v2650, 0.0
  %v2875 = vmax.f32 %v2651, 0.0
  %v2876 = vmax.f32 %v2652, 0.0
  %v2877 = vmax.f32 %v2653, 0.0
  %v2878 = vmax.f32 %v2654, 0.0
  %v2879 = vmax.f32 %v2655, 0.0
  %v2880 = vmax.f32 %v2656, 0.0
  %v2881 = vmax.f32 %v2657, 0.0
  %v2882 = vmax.f32 %v2658, 0.0
  %v2883 = vmax.f32 %v2659, 0.0
  %v2884 = vmax.f32 %v2660, 0.0
  %v2885 = vmax.f32 %v2661, 0.0
  %v2886 = vmax.f32 %v2662, 0.0
  %v2887 = vmax.f32 %v2663, 0.0
  %v2888 = vmax.f32 %v2664, 0.0
  %v2889 = vmax.f32 %v2665, 0.0
  %v2890 = vmax.f32 %v2666, 0.0
  %v2891 = vmax.f32 %v2667, 0.0
  %v2892 = vmax.f32 %v2668, 0.0
  %v2893 = vmax.f32 %v2669, 0.0
  %v2894 = vmax.f32 %v2670, 0.0
  %v2895 = vmax.f32 %v2671, 0.0
  %v2896 = vmax.f32 %v2672, 0.0
  %v2897 = vmax.f32 %v2673, 0.0
  %v2898 = vmax.f32 %v2674, 0.0
  %v2899 = vmax.f32 %v2675, 0.0
  %v2900 = vmax.f32 %v2676, 0.0
  %v2901 = vmax.f32 %v2677, 0.0
  %v2902 = vmax.f32 %v2678, 0.0
  %v2903 = vmax.f32 %v2679, 0.0
  %v2904 = vmax.f32 %v2680, 0.0
  %v2905 = vmax.f32 %v2681, 0.0
  %v2906 = vmax.f32 %v2682, 0.0
  %v2907 = vmax.f32 %v2683, 0.0
  %v2908 = vmax.f32 %v2684, 0.0
  %v2909 = vmax.f32 %v2685, 0.0
  %v2910 = vmax.f32 %v2686, 0.0
  %v2911 = vmax.f32 %v2687, 0.0
  %v2912 = vmax.f32 %v2688, 0.0
  %v2913 = vmax.f32 %v2689, 0.0
  %v2914 = vmax.f32 %v2690, 0.0
  %v2915 = vmax.f32 %v2691, 0.0
  %v2916 = vmax.f32 %v2692, 0.0
  %v2917 = vmax.f32 %v2693, 0.0
  %v2918 = vmax.f32 %v2694, 0.0
  %v2919 = vmax.f32 %v2695, 0.0
  %v2920 = vmax.f32 %v2696, 0.0
  %v2921 = vmax.f32 %v2697, 0.0
  %v2922 = vmax.f32 %v2698, 0.0
  %v2923 = vmax.f32 %v2699, 0.0
  %v2924 = vmax.f32 %v2700, 0.0
  %v2925 = vmax.f32 %v2701, 0.0
  %v2926 = vmax.f32 %v2702, 0.0
  %v2927 = vmax.f32 %v2703, 0.0
  %v2928 = vmax.f32 %v2704, 0.0
  %v2929 = vmax.f32 %v2705, 0.0
  %v2930 = vmax.f32 %v2706, 0.0
  %v2931 = vmax.f32 %v2707, 0.0
  %v2932 = vmax.f32 %v2708, 0.0
  %v2933 = vmax.f32 %v2709, 0.0
  %v2934 = vmax.f32 %v2710, 0.0
  %v2935 = vmax.f32 %v2711, 0.0
  %v2936 = vmax.f32 %v2712, 0.0
  %v2937 = vmax.f32 %v2713, 0.0
  %v2938 = vmax.f32 %v2714, 0.0
  %v2939 = vmax.f32 %v2715, 0.0
  %v2940 = vmax.f32 %v2716, 0.0
  %v2941 = vmax.f32 %v2717, 0.0
  %v2942 = vmax.f32 %v2718, 0.0
  %v2943 = vmax.f32 %v2719, 0.0
  %v2944 = vmax.f32 %v2720, 0.0
  %v2945 = vmax.f32 %v2721, 0.0
  %v2946 = vmax.f32 %v2722, 0.0
  %v2947 = vmax.f32 %v2723, 0.0
  %v2948 = vmax.f32 %v2724, 0.0
  %v2949 = vmax.f32 %v2725, 0.0
  %v2950 = vmax.f32 %v2726, 0.0
  %v2951 = vmax.f32 %v2727, 0.0
  %v2952 = vmax.f32 %v2728, 0.0
  %v2953 = vmax.f32 %v2729, 0.0
  %v2954 = vmax.f32 %v2730, 0.0
  %v2955 = vmax.f32 %v2731, 0.0
  %v2956 = vmax.f32 %v2732, 0.0
  %v2957 = vmax.f32 %v2733, 0.0
  %v2958 = vmax.f32 %v2734, 0.0
  %v2959 = vmax.f32 %v2735, 0.0
  %v2960 = vmax.f32 %v2736, 0.0
  %v2961 = vmax.f32 %v2737, 0.0
  %v2962 = vmax.f32 %v2738, 0.0
  %v2963 = vmax.f32 %v2739, 0.0
  %v2964 = vmax.f32 %v2740, 0.0
  %v2965 = vmax.f32 %v2741, 0.0
  %v2966 = vmax.f32 %v2742, 0.0
  %v2967 = vmax.f32 %v2743, 0.0
  %v2968 = vmax.f32 %v2744, 0.0
  %v2969 = vmax.f32 %v2745, 0.0
  %v2970 = vmax.f32 %v2746, 0.0
  %v2971 = vmax.f32 %v2747, 0.0
  %v2972 = vmax.f32 %v2748, 0.0
  %v2973 = vmax.f32 %v2749, 0.0
  %v2974 = vmax.f32 %v2750, 0.0
  %v2975 = vmax.f32 %v2751, 0.0
  %v2976 = vmax.f32 %v2752, 0.0
  %v2977 = vmax.f32 %v2753, 0.0
  %v2978 = vmax.f32 %v2754, 0.0
  %v2979 = vmax.f32 %v2755, 0.0
  %v2980 = vmax.f32 %v2756, 0.0
  %v2981 = vmax.f32 %v2757, 0.0
  %v2982 = vmax.f32 %v2758, 0.0
  %v2983 = vmax.f32 %v2759, 0.0
  %v2984 = vmax.f32 %v2760, 0.0
  %v2985 = vmax.f32 %v2761, 0.0
  %v2986 = vmax.f32 %v2762, 0.0
  %v2987 = vmax.f32 %v2763, 0.0
  %v2988 = vmax.f32 %v2764, 0.0
  %v2989 = vmax.f32 %v2765, 0.0
  %v2990 = vmax.f32 %v2766, 0.0
  %2991 = vst [vmem:[%s3] sm:$0xff] %v2767
  %2992 = vst [vmem:[%s3 + $0x8] sm:$0xff] %v2768
  %2993 = vst [vmem:[%s3 + $0x10] sm:$0xff] %v2769
  %2994 = vst [vmem:[%s3 + $0x18] sm:$0xff] %v2770
  %2995 = vst [vmem:[%s3 + $0x20] sm:$0xff] %v2771
  %2996 = vst [vmem:[%s3 + $0x28] sm:$0xff] %v2772
  %2997 = vst.msk [vmem:[%s3 + $0x30] sm:$0xff] %vm467, %v2773
  %2998 = vst [vmem:[%s3 + $0x38] sm:$0xff] %v2774
  %2999 = vst [vmem:[%s3 + $0x40] sm:$0xff] %v2775
  %3000 = vst [vmem:[%s3 + $0x48] sm:$0xff] %v2776
  %3001 = vst [vmem:[%s3 + $0x50] sm:$0xff] %v2777
  %3002 = vst [vmem:[%s3 + $0x58] sm:$0xff] %v2778
  %3003 = vst [vmem:[%s3 + $0x60] sm:$0xff] %v2779
  %3004 = vst.msk [vmem:[%s3 + $0x68] sm:$0xff] %vm467, %v2780
  %3005 = vst [vmem:[%s3 + $0x70] sm:$0xff] %v2781
  %3006 = vst [vmem:[%s3 + $0x78] sm:$0xff] %v2782
  %3007 = vst [vmem:[%s3 + $0x80] sm:$0xff] %v2783
  %3008 = vst [vmem:[%s3 + $0x88] sm:$0xff] %v2784
  %3009 = vst [vmem:[%s3 + $0x90] sm:$0xff] %v2785
  %3010 = vst [vmem:[%s3 + $0x98] sm:$0xff] %v2786
  %3011 = vst.msk [vmem:[%s3 + $0xa0] sm:$0xff] %vm467, %v2787
  %3012 = vst [vmem:[%s3 + $0xa8] sm:$0xff] %v2788
  %3013 = vst [vmem:[%s3 + $0xb0] sm:$0xff] %v2789
  %3014 = vst [vmem:[%s3 + $0xb8] sm:$0xff] %v2790
  %3015 = vst [vmem:[%s3 + $0xc0] sm:$0xff] %v2791
  %3016 = vst [vmem:[%s3 + $0xc8] sm:$0xff] %v2792
  %3017 = vst [vmem:[%s3 + $0xd0] sm:$0xff] %v2793
  %3018 = vst.msk [vmem:[%s3 + $0xd8] sm:$0xff] %vm467, %v2794
  %3019 = vst [vmem:[%s3 + $0xe0] sm:$0xff] %v2795
  %3020 = vst [vmem:[%s3 + $0xe8] sm:$0xff] %v2796
  %3021 = vst [vmem:[%s3 + $0xf0] sm:$0xff] %v2797
  %3022 = vst [vmem:[%s3 + $0xf8] sm:$0xff] %v2798
  %3023 = vst [vmem:[%s3 + $0x100] sm:$0xff] %v2799
  %3024 = vst [vmem:[%s3 + $0x108] sm:$0xff] %v2800
  %3025 = vst.msk [vmem:[%s3 + $0x110] sm:$0xff] %vm467, %v2801
  %3026 = vst [vmem:[%s3 + $0x118] sm:$0xff] %v2802
  %3027 = vst [vmem:[%s3 + $0x120] sm:$0xff] %v2803
  %3028 = vst [vmem:[%s3 + $0x128] sm:$0xff] %v2804
  %3029 = vst [vmem:[%s3 + $0x130] sm:$0xff] %v2805
  %3030 = vst [vmem:[%s3 + $0x138] sm:$0xff] %v2806
  %3031 = vst [vmem:[%s3 + $0x140] sm:$0xff] %v2807
  %3032 = vst.msk [vmem:[%s3 + $0x148] sm:$0xff] %vm467, %v2808
  %3033 = vst [vmem:[%s3 + $0x150] sm:$0xff] %v2809
  %3034 = vst [vmem:[%s3 + $0x158] sm:$0xff] %v2810
  %3035 = vst [vmem:[%s3 + $0x160] sm:$0xff] %v2811
  %3036 = vst [vmem:[%s3 + $0x168] sm:$0xff] %v2812
  %3037 = vst [vmem:[%s3 + $0x170] sm:$0xff] %v2813
  %3038 = vst [vmem:[%s3 + $0x178] sm:$0xff] %v2814
  %3039 = vst.msk [vmem:[%s3 + $0x180] sm:$0xff] %vm467, %v2815
  %3040 = vst [vmem:[%s3 + $0x188] sm:$0xff] %v2816
  %3041 = vst [vmem:[%s3 + $0x190] sm:$0xff] %v2817
  %3042 = vst [vmem:[%s3 + $0x198] sm:$0xff] %v2818
  %3043 = vst [vmem:[%s3 + $0x1a0] sm:$0xff] %v2819
  %3044 = vst [vmem:[%s3 + $0x1a8] sm:$0xff] %v2820
  %3045 = vst [vmem:[%s3 + $0x1b0] sm:$0xff] %v2821
  %3046 = vst.msk [vmem:[%s3 + $0x1b8] sm:$0xff] %vm467, %v2822
  %3047 = vst [vmem:[%s3 + $0x1c0] sm:$0xff] %v2823
  %3048 = vst [vmem:[%s3 + $0x1c8] sm:$0xff] %v2824
  %3049 = vst [vmem:[%s3 + $0x1d0] sm:$0xff] %v2825
  %3050 = vst [vmem:[%s3 + $0x1d8] sm:$0xff] %v2826
  %3051 = vst [vmem:[%s3 + $0x1e0] sm:$0xff] %v2827
  %3052 = vst [vmem:[%s3 + $0x1e8] sm:$0xff] %v2828
  %3053 = vst.msk [vmem:[%s3 + $0x1f0] sm:$0xff] %vm467, %v2829
  %3054 = vst [vmem:[%s3 + $0x1f8] sm:$0xff] %v2830
  %3055 = vst [vmem:[%s3 + $0x200] sm:$0xff] %v2831
  %3056 = vst [vmem:[%s3 + $0x208] sm:$0xff] %v2832
  %3057 = vst [vmem:[%s3 + $0x210] sm:$0xff] %v2833
  %3058 = vst [vmem:[%s3 + $0x218] sm:$0xff] %v2834
  %3059 = vst [vmem:[%s3 + $0x220] sm:$0xff] %v2835
  %3060 = vst.msk [vmem:[%s3 + $0x228] sm:$0xff] %vm467, %v2836
  %3061 = vst [vmem:[%s3 + $0x230] sm:$0xff] %v2837
  %3062 = vst [vmem:[%s3 + $0x238] sm:$0xff] %v2838
  %3063 = vst [vmem:[%s3 + $0x240] sm:$0xff] %v2839
  %3064 = vst [vmem:[%s3 + $0x248] sm:$0xff] %v2840
  %3065 = vst [vmem:[%s3 + $0x250] sm:$0xff] %v2841
  %3066 = vst [vmem:[%s3 + $0x258] sm:$0xff] %v2842
  %3067 = vst.msk [vmem:[%s3 + $0x260] sm:$0xff] %vm467, %v2843
  %3068 = vst [vmem:[%s3 + $0x268] sm:$0xff] %v2844
  %3069 = vst [vmem:[%s3 + $0x270] sm:$0xff] %v2845
  %3070 = vst [vmem:[%s3 + $0x278] sm:$0xff] %v2846
  %3071 = vst [vmem:[%s3 + $0x280] sm:$0xff] %v2847
  %3072 = vst [vmem:[%s3 + $0x288] sm:$0xff] %v2848
  %3073 = vst [vmem:[%s3 + $0x290] sm:$0xff] %v2849
  %3074 = vst.msk [vmem:[%s3 + $0x298] sm:$0xff] %vm467, %v2850
  %3075 = vst [vmem:[%s3 + $0x2a0] sm:$0xff] %v2851
  %3076 = vst [vmem:[%s3 + $0x2a8] sm:$0xff] %v2852
  %3077 = vst [vmem:[%s3 + $0x2b0] sm:$0xff] %v2853
  %3078 = vst [vmem:[%s3 + $0x2b8] sm:$0xff] %v2854
  %3079 = vst [vmem:[%s3 + $0x2c0] sm:$0xff] %v2855
  %3080 = vst [vmem:[%s3 + $0x2c8] sm:$0xff] %v2856
  %3081 = vst.msk [vmem:[%s3 + $0x2d0] sm:$0xff] %vm467, %v2857
  %3082 = vst [vmem:[%s3 + $0x2d8] sm:$0xff] %v2858
  %3083 = vst [vmem:[%s3 + $0x2e0] sm:$0xff] %v2859
  %3084 = vst [vmem:[%s3 + $0x2e8] sm:$0xff] %v2860
  %3085 = vst [vmem:[%s3 + $0x2f0] sm:$0xff] %v2861
  %3086 = vst [vmem:[%s3 + $0x2f8] sm:$0xff] %v2862
  %3087 = vst [vmem:[%s3 + $0x300] sm:$0xff] %v2863
  %3088 = vst.msk [vmem:[%s3 + $0x308] sm:$0xff] %vm467, %v2864
  %3089 = vst [vmem:[%s3 + $0x310] sm:$0xff] %v2865
  %3090 = vst [vmem:[%s3 + $0x318] sm:$0xff] %v2866
  %3091 = vst [vmem:[%s3 + $0x320] sm:$0xff] %v2867
  %3092 = vst [vmem:[%s3 + $0x328] sm:$0xff] %v2868
  %3093 = vst [vmem:[%s3 + $0x330] sm:$0xff] %v2869
  %3094 = vst [vmem:[%s3 + $0x338] sm:$0xff] %v2870
  %3095 = vst.msk [vmem:[%s3 + $0x340] sm:$0xff] %vm467, %v2871
  %3096 = vst [vmem:[%s3 + $0x348] sm:$0xff] %v2872
  %3097 = vst [vmem:[%s3 + $0x350] sm:$0xff] %v2873
  %3098 = vst [vmem:[%s3 + $0x358] sm:$0xff] %v2874
  %3099 = vst [vmem:[%s3 + $0x360] sm:$0xff] %v2875
  %3100 = vst [vmem:[%s3 + $0x368] sm:$0xff] %v2876
  %3101 = vst [vmem:[%s3 + $0x370] sm:$0xff] %v2877
  %3102 = vst.msk [vmem:[%s3 + $0x378] sm:$0xff] %vm467, %v2878
  %3103 = vst [vmem:[%s3 + $0x380] sm:$0xff] %v2879
  %3104 = vst [vmem:[%s3 + $0x388] sm:$0xff] %v2880
  %3105 = vst [vmem:[%s3 + $0x390] sm:$0xff] %v2881
  %3106 = vst [vmem:[%s3 + $0x398] sm:$0xff] %v2882
  %3107 = vst [vmem:[%s3 + $0x3a0] sm:$0xff] %v2883
  %3108 = vst [vmem:[%s3 + $0x3a8] sm:$0xff] %v2884
  %3109 = vst.msk [vmem:[%s3 + $0x3b0] sm:$0xff] %vm467, %v2885
  %3110 = vst [vmem:[%s3 + $0x3b8] sm:$0xff] %v2886
  %3111 = vst [vmem:[%s3 + $0x3c0] sm:$0xff] %v2887
  %3112 = vst [vmem:[%s3 + $0x3c8] sm:$0xff] %v2888
  %3113 = vst [vmem:[%s3 + $0x3d0] sm:$0xff] %v2889
  %3114 = vst [vmem:[%s3 + $0x3d8] sm:$0xff] %v2890
  %3115 = vst [vmem:[%s3 + $0x3e0] sm:$0xff] %v2891
  %3116 = vst.msk [vmem:[%s3 + $0x3e8] sm:$0xff] %vm467, %v2892
  %3117 = vst [vmem:[%s3 + $0x3f0] sm:$0xff] %v2893
  %3118 = vst [vmem:[%s3 + $0x3f8] sm:$0xff] %v2894
  %3119 = vst [vmem:[%s3 + $0x400] sm:$0xff] %v2895
  %3120 = vst [vmem:[%s3 + $0x408] sm:$0xff] %v2896
  %3121 = vst [vmem:[%s3 + $0x410] sm:$0xff] %v2897
  %3122 = vst [vmem:[%s3 + $0x418] sm:$0xff] %v2898
  %3123 = vst.msk [vmem:[%s3 + $0x420] sm:$0xff] %vm467, %v2899
  %3124 = vst [vmem:[%s3 + $0x428] sm:$0xff] %v2900
  %3125 = vst [vmem:[%s3 + $0x430] sm:$0xff] %v2901
  %3126 = vst [vmem:[%s3 + $0x438] sm:$0xff] %v2902
  %3127 = vst [vmem:[%s3 + $0x440] sm:$0xff] %v2903
  %3128 = vst [vmem:[%s3 + $0x448] sm:$0xff] %v2904
  %3129 = vst [vmem:[%s3 + $0x450] sm:$0xff] %v2905
  %3130 = vst.msk [vmem:[%s3 + $0x458] sm:$0xff] %vm467, %v2906
  %3131 = vst [vmem:[%s3 + $0x460] sm:$0xff] %v2907
  %3132 = vst [vmem:[%s3 + $0x468] sm:$0xff] %v2908
  %3133 = vst [vmem:[%s3 + $0x470] sm:$0xff] %v2909
  %3134 = vst [vmem:[%s3 + $0x478] sm:$0xff] %v2910
  %3135 = vst [vmem:[%s3 + $0x480] sm:$0xff] %v2911
  %3136 = vst [vmem:[%s3 + $0x488] sm:$0xff] %v2912
  %3137 = vst.msk [vmem:[%s3 + $0x490] sm:$0xff] %vm467, %v2913
  %3138 = vst [vmem:[%s3 + $0x498] sm:$0xff] %v2914
  %3139 = vst [vmem:[%s3 + $0x4a0] sm:$0xff] %v2915
  %3140 = vst [vmem:[%s3 + $0x4a8] sm:$0xff] %v2916
  %3141 = vst [vmem:[%s3 + $0x4b0] sm:$0xff] %v2917
  %3142 = vst [vmem:[%s3 + $0x4b8] sm:$0xff] %v2918
  %3143 = vst [vmem:[%s3 + $0x4c0] sm:$0xff] %v2919
  %3144 = vst.msk [vmem:[%s3 + $0x4c8] sm:$0xff] %vm467, %v2920
  %3145 = vst [vmem:[%s3 + $0x4d0] sm:$0xff] %v2921
  %3146 = vst [vmem:[%s3 + $0x4d8] sm:$0xff] %v2922
  %3147 = vst [vmem:[%s3 + $0x4e0] sm:$0xff] %v2923
  %3148 = vst [vmem:[%s3 + $0x4e8] sm:$0xff] %v2924
  %3149 = vst [vmem:[%s3 + $0x4f0] sm:$0xff] %v2925
  %3150 = vst [vmem:[%s3 + $0x4f8] sm:$0xff] %v2926
  %3151 = vst.msk [vmem:[%s3 + $0x500] sm:$0xff] %vm467, %v2927
  %3152 = vst [vmem:[%s3 + $0x508] sm:$0xff] %v2928
  %3153 = vst [vmem:[%s3 + $0x510] sm:$0xff] %v2929
  %3154 = vst [vmem:[%s3 + $0x518] sm:$0xff] %v2930
  %3155 = vst [vmem:[%s3 + $0x520] sm:$0xff] %v2931
  %3156 = vst [vmem:[%s3 + $0x528] sm:$0xff] %v2932
  %3157 = vst [vmem:[%s3 + $0x530] sm:$0xff] %v2933
  %3158 = vst.msk [vmem:[%s3 + $0x538] sm:$0xff] %vm467, %v2934
  %3159 = vst [vmem:[%s3 + $0x540] sm:$0xff] %v2935
  %3160 = vst [vmem:[%s3 + $0x548] sm:$0xff] %v2936
  %3161 = vst [vmem:[%s3 + $0x550] sm:$0xff] %v2937
  %3162 = vst [vmem:[%s3 + $0x558] sm:$0xff] %v2938
  %3163 = vst [vmem:[%s3 + $0x560] sm:$0xff] %v2939
  %3164 = vst [vmem:[%s3 + $0x568] sm:$0xff] %v2940
  %3165 = vst.msk [vmem:[%s3 + $0x570] sm:$0xff] %vm467, %v2941
  %3166 = vst [vmem:[%s3 + $0x578] sm:$0xff] %v2942
  %3167 = vst [vmem:[%s3 + $0x580] sm:$0xff] %v2943
  %3168 = vst [vmem:[%s3 + $0x588] sm:$0xff] %v2944
  %3169 = vst [vmem:[%s3 + $0x590] sm:$0xff] %v2945
  %3170 = vst [vmem:[%s3 + $0x598] sm:$0xff] %v2946
  %3171 = vst [vmem:[%s3 + $0x5a0] sm:$0xff] %v2947
  %3172 = vst.msk [vmem:[%s3 + $0x5a8] sm:$0xff] %vm467, %v2948
  %3173 = vst [vmem:[%s3 + $0x5b0] sm:$0xff] %v2949
  %3174 = vst [vmem:[%s3 + $0x5b8] sm:$0xff] %v2950
  %3175 = vst [vmem:[%s3 + $0x5c0] sm:$0xff] %v2951
  %3176 = vst [vmem:[%s3 + $0x5c8] sm:$0xff] %v2952
  %3177 = vst [vmem:[%s3 + $0x5d0] sm:$0xff] %v2953
  %3178 = vst [vmem:[%s3 + $0x5d8] sm:$0xff] %v2954
  %3179 = vst.msk [vmem:[%s3 + $0x5e0] sm:$0xff] %vm467, %v2955
  %3180 = vst [vmem:[%s3 + $0x5e8] sm:$0xff] %v2956
  %3181 = vst [vmem:[%s3 + $0x5f0] sm:$0xff] %v2957
  %3182 = vst [vmem:[%s3 + $0x5f8] sm:$0xff] %v2958
  %3183 = vst [vmem:[%s3 + $0x600] sm:$0xff] %v2959
  %3184 = vst [vmem:[%s3 + $0x608] sm:$0xff] %v2960
  %3185 = vst [vmem:[%s3 + $0x610] sm:$0xff] %v2961
  %3186 = vst.msk [vmem:[%s3 + $0x618] sm:$0xff] %vm467, %v2962
  %3187 = vst [vmem:[%s3 + $0x620] sm:$0xff] %v2963
  %3188 = vst [vmem:[%s3 + $0x628] sm:$0xff] %v2964
  %3189 = vst [vmem:[%s3 + $0x630] sm:$0xff] %v2965
  %3190 = vst [vmem:[%s3 + $0x638] sm:$0xff] %v2966
  %3191 = vst [vmem:[%s3 + $0x640] sm:$0xff] %v2967
  %3192 = vst [vmem:[%s3 + $0x648] sm:$0xff] %v2968
  %3193 = vst.msk [vmem:[%s3 + $0x650] sm:$0xff] %vm467, %v2969
  %3194 = vst [vmem:[%s3 + $0x658] sm:$0xff] %v2970
  %3195 = vst [vmem:[%s3 + $0x660] sm:$0xff] %v2971
  %3196 = vst [vmem:[%s3 + $0x668] sm:$0xff] %v2972
  %3197 = vst [vmem:[%s3 + $0x670] sm:$0xff] %v2973
  %3198 = vst [vmem:[%s3 + $0x678] sm:$0xff] %v2974
  %3199 = vst [vmem:[%s3 + $0x680] sm:$0xff] %v2975
  %3200 = vst.msk [vmem:[%s3 + $0x688] sm:$0xff] %vm467, %v2976
  %3201 = vst [vmem:[%s3 + $0x690] sm:$0xff] %v2977
  %3202 = vst [vmem:[%s3 + $0x698] sm:$0xff] %v2978
  %3203 = vst [vmem:[%s3 + $0x6a0] sm:$0xff] %v2979
  %3204 = vst [vmem:[%s3 + $0x6a8] sm:$0xff] %v2980
  %3205 = vst [vmem:[%s3 + $0x6b0] sm:$0xff] %v2981
  %3206 = vst [vmem:[%s3 + $0x6b8] sm:$0xff] %v2982
  %3207 = vst.msk [vmem:[%s3 + $0x6c0] sm:$0xff] %vm467, %v2983
  %3208 = vst [vmem:[%s3 + $0x6c8] sm:$0xff] %v2984
  %3209 = vst [vmem:[%s3 + $0x6d0] sm:$0xff] %v2985
  %3210 = vst [vmem:[%s3 + $0x6d8] sm:$0xff] %v2986
  %3211 = vst [vmem:[%s3 + $0x6e0] sm:$0xff] %v2987
  %3212 = vst [vmem:[%s3 + $0x6e8] sm:$0xff] %v2988
  %3213 = vst [vmem:[%s3 + $0x6f0] sm:$0xff] %v2989
  %3214 = vst.msk [vmem:[%s3 + $0x6f8] sm:$0xff] %vm467, %v2990
  // Predicated region
  $region14: #{tpu_custom_call.1} parent=0 // pred_check
    _
  $region15: #{tpu_custom_call.1} parent=0 // pred_check_branch
    %3216 = sbr.rel (0) target = $region17
  $region16: #{tpu_custom_call.1} parent=0 // pred_region
    _
  $region17: #{tpu_custom_call.1} parent=0 // pred_fallthru
    _
  // Predicated region
  $region18: #{tpu_custom_call.1} parent=0 // pred_check
    _
  $region19: #{tpu_custom_call.1} parent=0 // pred_check_branch
    %3218 = sbr.rel (0) target = $region21
  $region20: #{tpu_custom_call.1} parent=0 // pred_region
    _
  $region21: #{tpu_custom_call.1} parent=0 // pred_fallthru
    _

</llo_original>
